<compile_context>
chip_gen: v6e
topology: v6e:2x2x1
jax: 0.10.0
libtpu: 0.0.40
codegen_flags: <defaults>
</compile_context>

<pallas_src>
import jax
import jax.numpy as jnp
from jax import lax
from jax.experimental import pallas as pl
from jax.experimental.pallas import tpu as pltpu

_VMEM = pl.BlockSpec(memory_space=pltpu.MemorySpace.VMEM)

# Tap order k = dy*3 + dx; offsets relative to the output pixel (padding = 1).
_TAPS = tuple((dy - 1, dx - 1) for dy in range(3) for dx in range(3))
_BN_EPS = 1e-5


# ------------------------------ Pallas kernel ------------------------------

def _down_fused_kernel(x_ref, w1_ref, g1_ref, b1_ref, w2_ref, g2_ref, b2_ref,
                       o_ref, pb1_ref, pb2_ref):
    """Fused MaxPool2d(2,2) + (Conv3x3(no bias) -> BatchNorm -> ReLU) x 2.

    x_ref : (N, Hp, 2, Wp, 2*Cin)  pooling-window view of the NHWC input
    w1_ref: (9*Cin, C)             conv1 weights, rows ordered (tap, in_chan)
    w2_ref: (9*C,   C)             conv2 weights
    g*/b* : (1, C)                 BatchNorm gamma / beta
    o_ref : (N*Hp*Wp, C)
    pb1/pb2: VMEM scratch patch buffers (N,Hp,Wp,9*Cin) / (N,Hp,Wp,9*C)
    """
    N, Hp, _, Wp, C2 = x_ref.shape
    Cin = C2 // 2
    C = o_ref.shape[-1]
    M = N * Hp * Wp

    # ---- MaxPool2d(kernel=2, stride=2), fully in-kernel --------------------
    x = x_ref[...]                                  # (N, Hp, 2, Wp, 2*Cin)
    v = jnp.maximum(x[:, :, 0], x[:, :, 1])         # row-pair max
    p = jnp.maximum(v[..., :Cin], v[..., Cin:])     # col-pair max -> (N,Hp,Wp,Cin)

    # ---- Conv3x3 (single folded matmul) + BN(train) + ReLU ------------------
    def conv_bn_relu(feat, cin, pb_ref, w_ref, g_ref, b_ref):
        # Build the (M, 9*cin) im2col patch matrix in VMEM scratch.  The zero
        # init provides the Conv2d(padding=1) border zeros.
        pb_ref[...] = jnp.zeros_like(pb_ref)
        for k, (oy, ox) in enumerate(_TAPS):        # static unroll: 9 stores
            i0, i1 = max(0, -oy), Hp - max(0, oy)
            j0, j1 = max(0, -ox), Wp - max(0, ox)
            pb_ref[:, i0:i1, j0:j1, k * cin:(k + 1) * cin] = (
                feat[:, i0 + oy:i1 + oy, j0 + ox:j1 + ox, :])
        patches = pb_ref[...].reshape(M, 9 * cin)   # layout-trivial reshape
        # One MXU matmul with contraction depth 9*cin (vs 9 tiny-K matmuls).
        acc = jnp.dot(patches, w_ref[...], preferred_element_type=jnp.float32)
        # BatchNorm2d training mode: global batch mean / biased var, eps=1e-5.
        mean = jnp.mean(acc, axis=0, keepdims=True)
        var = jnp.mean((acc - mean) ** 2, axis=0, keepdims=True)
        y = (acc - mean) * lax.rsqrt(var + _BN_EPS) * g_ref[...] + b_ref[...]
        return jnp.maximum(y, 0.0)                  # ReLU

    h1 = conv_bn_relu(p, Cin, pb1_ref, w1_ref, g1_ref, b1_ref)   # (M, C)
    h1 = h1.reshape(N, Hp, Wp, C)                   # layout-trivial reshape
    o_ref[...] = conv_bn_relu(h1, C, pb2_ref, w2_ref, g2_ref, b2_ref)


# ------------------------------ JAX wrapper --------------------------------

def down_forward(params, x_nchw):
    """Down.forward: MaxPool2d(2,2) -> DoubleConv.  NCHW in / NCHW out."""
    N, Cin, H, W = x_nchw.shape
    Hp, Wp = H // 2, W // 2
    C = params['w1'].shape[-1]
    M = N * Hp * Wp

    # NCHW -> NHWC once (channels on the lane axis for the conv contraction),
    # then a data-movement-free reshape exposing the 2x2 pooling windows.
    x = jnp.transpose(x_nchw, (0, 2, 3, 1)).reshape(N, Hp, 2, Wp, 2 * Cin)

    out = pl.pallas_call(
        _down_fused_kernel,
        out_shape=jax.ShapeDtypeStruct((M, C), jnp.float32),
        in_specs=[_VMEM] * 7,
        out_specs=_VMEM,
        scratch_shapes=[pltpu.VMEM((N, Hp, Wp, 9 * Cin), jnp.float32),
                        pltpu.VMEM((N, Hp, Wp, 9 * C), jnp.float32)],
        compiler_params=pltpu.CompilerParams(vmem_limit_bytes=32 << 20),
    )(x.astype(jnp.float32),
      params['w1'].reshape(9 * Cin, C),
      params['g1'].reshape(1, C), params['b1'].reshape(1, C),
      params['w2'].reshape(9 * C, C),
      params['g2'].reshape(1, C), params['b2'].reshape(1, C))

    return jnp.transpose(out.reshape(N, Hp, Wp, C), (0, 3, 1, 2))  # -> NCHW


# ---------------------- pure-JAX reference (for checking) ------------------

def _down_reference(params, x_nchw):
    x = jnp.transpose(x_nchw, (0, 2, 3, 1))                        # NHWC
    N, H, W, Cin = x.shape
    x = x.reshape(N, H // 2, 2, W // 2, 2, Cin).max(axis=(2, 4))   # maxpool 2x2

    def conv_bn_relu(y, w, g, b):
        y = lax.conv_general_dilated(y, w, (1, 1), 'SAME',
                                     dimension_numbers=('NHWC', 'HWIO', 'NHWC'))
        mean = jnp.mean(y, axis=(0, 1, 2), keepdims=True)
        var = jnp.mean((y - mean) ** 2, axis=(0, 1, 2), keepdims=True)
        y = (y - mean) * lax.rsqrt(var + _BN_EPS) * g + b
        return jnp.maximum(y, 0.0)

    x = conv_bn_relu(x, params['w1'], params['g1'], params['b1'])
    x = conv_bn_relu(x, params['w2'], params['g2'], params['b2'])
    return jnp.transpose(x, (0, 3, 1, 2))


# ---------------------------- parameter setup ------------------------------

def init_params(key, in_channels, out_channels):
    keys = jax.random.split(key, 6)

    def conv_w(k, cin, cout):
        fan_in = float(cin * 9)
        return (jax.random.normal(k, (3, 3, cin, cout), jnp.float32)
                / jnp.sqrt(fan_in))

    return dict(
        w1=conv_w(keys[0], in_channels, out_channels),
        g1=1.0 + 0.1 * jax.random.normal(keys[1], (out_channels,), jnp.float32),
        b1=0.1 * jax.random.normal(keys[2], (out_channels,), jnp.float32),
        w2=conv_w(keys[3], out_channels, out_channels),
        g2=1.0 + 0.1 * jax.random.normal(keys[4], (out_channels,), jnp.float32),
        b2=0.1 * jax.random.normal(keys[5], (out_channels,), jnp.float32),
    )


if __name__ == "__main__":
    key = jax.random.PRNGKey(0)
    pkey, xkey = jax.random.split(key)

    in_channels, out_channels = 4, 16
    params = init_params(pkey, in_channels, out_channels)

    x = jax.random.normal(xkey, (2, in_channels, 16, 16), jnp.float32)  # NCHW

    fwd = jax.jit(down_forward)
    out = fwd(params, x)
    jax.block_until_ready(out)

    assert out.shape == (2, out_channels, 8, 8), out.shape
    assert out.dtype == jnp.float32

    ref = jax.jit(_down_reference)(params, x)
    jax.block_until_ready(ref)
    max_err = float(jnp.max(jnp.abs(out - ref)))
    # Loose tolerance covers MXU-vs-XLA default matmul/conv precision deltas;
    # any indexing/BN bug would show up as O(1) error.
    assert max_err < 5e-2, f"max abs error vs reference: {max_err}"

    print("KERNEL_OK")
</pallas_src>

<mosaic_0001>
module attributes {stable_mosaic.version = 11 : i64} {
  func.func @_down_fused_kernel(%arg0: memref<2x8x2x8x8xf32, #tpu.memory_space<vmem>>, %arg1: memref<36x16xf32, #tpu.memory_space<vmem>>, %arg2: memref<1x16xf32, #tpu.memory_space<vmem>>, %arg3: memref<1x16xf32, #tpu.memory_space<vmem>>, %arg4: memref<144x16xf32, #tpu.memory_space<vmem>>, %arg5: memref<1x16xf32, #tpu.memory_space<vmem>>, %arg6: memref<1x16xf32, #tpu.memory_space<vmem>>, %arg7: memref<128x16xf32, #tpu.memory_space<vmem>>, %arg8: memref<2x8x8x36xf32, #tpu.memory_space<vmem>>, %arg9: memref<2x8x8x144xf32, #tpu.memory_space<vmem>>) attributes {dimension_semantics = [], scalar_prefetch = 0 : i64, scratch_operands = 2 : i64, tpu.core_type = #tpu.core_type<tc>} {
    %c0 = arith.constant 0 : index
    %c0_0 = arith.constant 0 : index
    %c0_1 = arith.constant 0 : index
    %c0_2 = arith.constant 0 : index
    %c0_3 = arith.constant 0 : index
    %0 = vector.load %arg0[%c0, %c0_0, %c0_1, %c0_2, %c0_3] : memref<2x8x2x8x8xf32, #tpu.memory_space<vmem>>, vector<2x8x2x8x8xf32>
    %1 = vector.extract_strided_slice %0 {offsets = [0, 0, 0, 0, 0], sizes = [2, 8, 1, 8, 8], strides = [1, 1, 1, 1, 1]} : vector<2x8x2x8x8xf32> to vector<2x8x1x8x8xf32>
    %2 = vector.shape_cast %1 : vector<2x8x1x8x8xf32> to vector<2x8x8x8xf32>
    %3 = vector.extract_strided_slice %0 {offsets = [0, 0, 1, 0, 0], sizes = [2, 8, 1, 8, 8], strides = [1, 1, 1, 1, 1]} : vector<2x8x2x8x8xf32> to vector<2x8x1x8x8xf32>
    %4 = vector.shape_cast %3 : vector<2x8x1x8x8xf32> to vector<2x8x8x8xf32>
    %5 = arith.maximumf %2, %4 : vector<2x8x8x8xf32>
    %6 = vector.extract_strided_slice %5 {offsets = [0, 0, 0, 0], sizes = [2, 8, 8, 4], strides = [1, 1, 1, 1]} : vector<2x8x8x8xf32> to vector<2x8x8x4xf32>
    %7 = vector.extract_strided_slice %5 {offsets = [0, 0, 0, 4], sizes = [2, 8, 8, 4], strides = [1, 1, 1, 1]} : vector<2x8x8x8xf32> to vector<2x8x8x4xf32>
    %8 = arith.maximumf %6, %7 : vector<2x8x8x4xf32>
    %cst = arith.constant 0.000000e+00 : f32
    %9 = vector.broadcast %cst : f32 to vector<2x8x8x36xf32>
    %c0_4 = arith.constant 0 : index
    %c0_5 = arith.constant 0 : index
    %c0_6 = arith.constant 0 : index
    %c0_7 = arith.constant 0 : index
    %10 = vector.load %arg8[%c0_4, %c0_5, %c0_6, %c0_7] : memref<2x8x8x36xf32, #tpu.memory_space<vmem>>, vector<2x8x8x36xf32>
    tpu.vector_store %arg8[%c0_4, %c0_5, %c0_6, %c0_7], %9 {strides = array<i32>} : memref<2x8x8x36xf32, #tpu.memory_space<vmem>>, vector<2x8x8x36xf32>,
    %11 = vector.extract_strided_slice %8 {offsets = [0, 0, 0, 0], sizes = [2, 7, 7, 4], strides = [1, 1, 1, 1]} : vector<2x8x8x4xf32> to vector<2x7x7x4xf32>
    %c0_8 = arith.constant 0 : index
    %c1 = arith.constant 1 : index
    %c1_9 = arith.constant 1 : index
    %c0_10 = arith.constant 0 : index
    %12 = vector.load %arg8[%c0_8, %c1, %c1_9, %c0_10] : memref<2x8x8x36xf32, #tpu.memory_space<vmem>>, vector<2x7x7x4xf32>
    tpu.vector_store %arg8[%c0_8, %c1, %c1_9, %c0_10], %11 {strides = array<i32>} : memref<2x8x8x36xf32, #tpu.memory_space<vmem>>, vector<2x7x7x4xf32>,
    %13 = vector.extract_strided_slice %8 {offsets = [0, 0, 0, 0], sizes = [2, 7, 8, 4], strides = [1, 1, 1, 1]} : vector<2x8x8x4xf32> to vector<2x7x8x4xf32>
    %c0_11 = arith.constant 0 : index
    %c1_12 = arith.constant 1 : index
    %c0_13 = arith.constant 0 : index
    %c4 = arith.constant 4 : index
    %14 = vector.load %arg8[%c0_11, %c1_12, %c0_13, %c4] : memref<2x8x8x36xf32, #tpu.memory_space<vmem>>, vector<2x7x8x4xf32>
    tpu.vector_store %arg8[%c0_11, %c1_12, %c0_13, %c4], %13 {strides = array<i32>} : memref<2x8x8x36xf32, #tpu.memory_space<vmem>>, vector<2x7x8x4xf32>,
    %15 = vector.extract_strided_slice %8 {offsets = [0, 0, 1, 0], sizes = [2, 7, 7, 4], strides = [1, 1, 1, 1]} : vector<2x8x8x4xf32> to vector<2x7x7x4xf32>
    %c0_14 = arith.constant 0 : index
    %c1_15 = arith.constant 1 : index
    %c0_16 = arith.constant 0 : index
    %c8 = arith.constant 8 : index
    %16 = vector.load %arg8[%c0_14, %c1_15, %c0_16, %c8] : memref<2x8x8x36xf32, #tpu.memory_space<vmem>>, vector<2x7x7x4xf32>
    tpu.vector_store %arg8[%c0_14, %c1_15, %c0_16, %c8], %15 {strides = array<i32>} : memref<2x8x8x36xf32, #tpu.memory_space<vmem>>, vector<2x7x7x4xf32>,
    %17 = vector.extract_strided_slice %8 {offsets = [0, 0, 0, 0], sizes = [2, 8, 7, 4], strides = [1, 1, 1, 1]} : vector<2x8x8x4xf32> to vector<2x8x7x4xf32>
    %c0_17 = arith.constant 0 : index
    %c0_18 = arith.constant 0 : index
    %c1_19 = arith.constant 1 : index
    %c12 = arith.constant 12 : index
    %18 = vector.load %arg8[%c0_17, %c0_18, %c1_19, %c12] : memref<2x8x8x36xf32, #tpu.memory_space<vmem>>, vector<2x8x7x4xf32>
    tpu.vector_store %arg8[%c0_17, %c0_18, %c1_19, %c12], %17 {strides = array<i32>} : memref<2x8x8x36xf32, #tpu.memory_space<vmem>>, vector<2x8x7x4xf32>,
    %c0_20 = arith.constant 0 : index
    %c0_21 = arith.constant 0 : index
    %c0_22 = arith.constant 0 : index
    %c16 = arith.constant 16 : index
    %19 = vector.load %arg8[%c0_20, %c0_21, %c0_22, %c16] : memref<2x8x8x36xf32, #tpu.memory_space<vmem>>, vector<2x8x8x4xf32>
    tpu.vector_store %arg8[%c0_20, %c0_21, %c0_22, %c16], %8 {strides = array<i32>} : memref<2x8x8x36xf32, #tpu.memory_space<vmem>>, vector<2x8x8x4xf32>,
    %20 = vector.extract_strided_slice %8 {offsets = [0, 0, 1, 0], sizes = [2, 8, 7, 4], strides = [1, 1, 1, 1]} : vector<2x8x8x4xf32> to vector<2x8x7x4xf32>
    %c0_23 = arith.constant 0 : index
    %c0_24 = arith.constant 0 : index
    %c0_25 = arith.constant 0 : index
    %c20 = arith.constant 20 : index
    %21 = vector.load %arg8[%c0_23, %c0_24, %c0_25, %c20] : memref<2x8x8x36xf32, #tpu.memory_space<vmem>>, vector<2x8x7x4xf32>
    tpu.vector_store %arg8[%c0_23, %c0_24, %c0_25, %c20], %20 {strides = array<i32>} : memref<2x8x8x36xf32, #tpu.memory_space<vmem>>, vector<2x8x7x4xf32>,
    %22 = vector.extract_strided_slice %8 {offsets = [0, 1, 0, 0], sizes = [2, 7, 7, 4], strides = [1, 1, 1, 1]} : vector<2x8x8x4xf32> to vector<2x7x7x4xf32>
    %c0_26 = arith.constant 0 : index
    %c0_27 = arith.constant 0 : index
    %c1_28 = arith.constant 1 : index
    %c24 = arith.constant 24 : index
    %23 = vector.load %arg8[%c0_26, %c0_27, %c1_28, %c24] : memref<2x8x8x36xf32, #tpu.memory_space<vmem>>, vector<2x7x7x4xf32>
    tpu.vector_store %arg8[%c0_26, %c0_27, %c1_28, %c24], %22 {strides = array<i32>} : memref<2x8x8x36xf32, #tpu.memory_space<vmem>>, vector<2x7x7x4xf32>,
    %24 = vector.extract_strided_slice %8 {offsets = [0, 1, 0, 0], sizes = [2, 7, 8, 4], strides = [1, 1, 1, 1]} : vector<2x8x8x4xf32> to vector<2x7x8x4xf32>
    %c0_29 = arith.constant 0 : index
    %c0_30 = arith.constant 0 : index
    %c0_31 = arith.constant 0 : index
    %c28 = arith.constant 28 : index
    %25 = vector.load %arg8[%c0_29, %c0_30, %c0_31, %c28] : memref<2x8x8x36xf32, #tpu.memory_space<vmem>>, vector<2x7x8x4xf32>
    tpu.vector_store %arg8[%c0_29, %c0_30, %c0_31, %c28], %24 {strides = array<i32>} : memref<2x8x8x36xf32, #tpu.memory_space<vmem>>, vector<2x7x8x4xf32>,
    %26 = vector.extract_strided_slice %8 {offsets = [0, 1, 1, 0], sizes = [2, 7, 7, 4], strides = [1, 1, 1, 1]} : vector<2x8x8x4xf32> to vector<2x7x7x4xf32>
    %c0_32 = arith.constant 0 : index
    %c0_33 = arith.constant 0 : index
    %c0_34 = arith.constant 0 : index
    %c32 = arith.constant 32 : index
    %27 = vector.load %arg8[%c0_32, %c0_33, %c0_34, %c32] : memref<2x8x8x36xf32, #tpu.memory_space<vmem>>, vector<2x7x7x4xf32>
    tpu.vector_store %arg8[%c0_32, %c0_33, %c0_34, %c32], %26 {strides = array<i32>} : memref<2x8x8x36xf32, #tpu.memory_space<vmem>>, vector<2x7x7x4xf32>,
    %c0_35 = arith.constant 0 : index
    %c0_36 = arith.constant 0 : index
    %c0_37 = arith.constant 0 : index
    %c0_38 = arith.constant 0 : index
    %28 = vector.load %arg8[%c0_35, %c0_36, %c0_37, %c0_38] : memref<2x8x8x36xf32, #tpu.memory_space<vmem>>, vector<2x8x8x36xf32>
    %29 = vector.shape_cast %28 : vector<2x8x8x36xf32> to vector<128x36xf32>
    %c0_39 = arith.constant 0 : index
    %c0_40 = arith.constant 0 : index
    %30 = vector.load %arg1[%c0_39, %c0_40] : memref<36x16xf32, #tpu.memory_space<vmem>>, vector<36x16xf32>
    %cst_41 = arith.constant dense<0.000000e+00> : vector<128x16xf32>
    %31 = tpu.matmul %29, %30, %cst_41 {dimension_numbers = #tpu.dot_dimension_numbers<[1], [0], [0], [1], [0, 0, 1, 1], [], []>} : vector<128x36xf32>, vector<36x16xf32>, vector<128x16xf32> -> vector<128x16xf32>
    %cst_42 = arith.constant dense<0.000000e+00> : vector<16xf32>
    %32 = vector.multi_reduction <add>, %31, %cst_42 [0] : vector<128x16xf32> to vector<16xf32>
    %33 = vector.shape_cast %32 : vector<16xf32> to vector<1x16xf32>
    %cst_43 = arith.constant 1.280000e+02 : f32
    %34 = vector.broadcast %cst_43 : f32 to vector<1x16xf32>
    %35 = arith.divf %33, %34 : vector<1x16xf32>
    %36 = vector.broadcast %35 : vector<1x16xf32> to vector<128x16xf32>
    %37 = arith.subf %31, %36 : vector<128x16xf32>
    %38 = arith.mulf %37, %37 : vector<128x16xf32>
    %cst_44 = arith.constant dense<0.000000e+00> : vector<16xf32>
    %39 = vector.multi_reduction <add>, %38, %cst_44 [0] : vector<128x16xf32> to vector<16xf32>
    %40 = vector.shape_cast %39 : vector<16xf32> to vector<1x16xf32>
    %cst_45 = arith.constant 1.280000e+02 : f32
    %41 = vector.broadcast %cst_45 : f32 to vector<1x16xf32>
    %42 = arith.divf %40, %41 : vector<1x16xf32>
    %43 = vector.broadcast %35 : vector<1x16xf32> to vector<128x16xf32>
    %44 = arith.subf %31, %43 : vector<128x16xf32>
    %cst_46 = arith.constant 9.99999974E-6 : f32
    %45 = vector.broadcast %cst_46 : f32 to vector<1x16xf32>
    %46 = arith.addf %42, %45 : vector<1x16xf32>
    %47 = math.rsqrt %46 : vector<1x16xf32>
    %48 = vector.broadcast %47 : vector<1x16xf32> to vector<128x16xf32>
    %49 = arith.mulf %44, %48 : vector<128x16xf32>
    %c0_47 = arith.constant 0 : index
    %c0_48 = arith.constant 0 : index
    %50 = vector.load %arg2[%c0_47, %c0_48] : memref<1x16xf32, #tpu.memory_space<vmem>>, vector<1x16xf32>
    %51 = vector.broadcast %50 : vector<1x16xf32> to vector<128x16xf32>
    %52 = arith.mulf %49, %51 : vector<128x16xf32>
    %c0_49 = arith.constant 0 : index
    %c0_50 = arith.constant 0 : index
    %53 = vector.load %arg3[%c0_49, %c0_50] : memref<1x16xf32, #tpu.memory_space<vmem>>, vector<1x16xf32>
    %54 = vector.broadcast %53 : vector<1x16xf32> to vector<128x16xf32>
    %55 = arith.addf %52, %54 : vector<128x16xf32>
    %cst_51 = arith.constant 0.000000e+00 : f32
    %56 = vector.broadcast %cst_51 : f32 to vector<128x16xf32>
    %57 = arith.maximumf %55, %56 : vector<128x16xf32>
    %58 = vector.shape_cast %57 : vector<128x16xf32> to vector<2x8x8x16xf32>
    %cst_52 = arith.constant 0.000000e+00 : f32
    %59 = vector.broadcast %cst_52 : f32 to vector<2x8x8x144xf32>
    %c0_53 = arith.constant 0 : index
    %c0_54 = arith.constant 0 : index
    %c0_55 = arith.constant 0 : index
    %c0_56 = arith.constant 0 : index
    %60 = vector.load %arg9[%c0_53, %c0_54, %c0_55, %c0_56] : memref<2x8x8x144xf32, #tpu.memory_space<vmem>>, vector<2x8x8x144xf32>
    tpu.vector_store %arg9[%c0_53, %c0_54, %c0_55, %c0_56], %59 {strides = array<i32>} : memref<2x8x8x144xf32, #tpu.memory_space<vmem>>, vector<2x8x8x144xf32>,
    %61 = vector.extract_strided_slice %58 {offsets = [0, 0, 0, 0], sizes = [2, 7, 7, 16], strides = [1, 1, 1, 1]} : vector<2x8x8x16xf32> to vector<2x7x7x16xf32>
    %c0_57 = arith.constant 0 : index
    %c1_58 = arith.constant 1 : index
    %c1_59 = arith.constant 1 : index
    %c0_60 = arith.constant 0 : index
    %62 = vector.load %arg9[%c0_57, %c1_58, %c1_59, %c0_60] : memref<2x8x8x144xf32, #tpu.memory_space<vmem>>, vector<2x7x7x16xf32>
    tpu.vector_store %arg9[%c0_57, %c1_58, %c1_59, %c0_60], %61 {strides = array<i32>} : memref<2x8x8x144xf32, #tpu.memory_space<vmem>>, vector<2x7x7x16xf32>,
    %63 = vector.extract_strided_slice %58 {offsets = [0, 0, 0, 0], sizes = [2, 7, 8, 16], strides = [1, 1, 1, 1]} : vector<2x8x8x16xf32> to vector<2x7x8x16xf32>
    %c0_61 = arith.constant 0 : index
    %c1_62 = arith.constant 1 : index
    %c0_63 = arith.constant 0 : index
    %c16_64 = arith.constant 16 : index
    %64 = vector.load %arg9[%c0_61, %c1_62, %c0_63, %c16_64] : memref<2x8x8x144xf32, #tpu.memory_space<vmem>>, vector<2x7x8x16xf32>
    tpu.vector_store %arg9[%c0_61, %c1_62, %c0_63, %c16_64], %63 {strides = array<i32>} : memref<2x8x8x144xf32, #tpu.memory_space<vmem>>, vector<2x7x8x16xf32>,
    %65 = vector.extract_strided_slice %58 {offsets = [0, 0, 1, 0], sizes = [2, 7, 7, 16], strides = [1, 1, 1, 1]} : vector<2x8x8x16xf32> to vector<2x7x7x16xf32>
    %c0_65 = arith.constant 0 : index
    %c1_66 = arith.constant 1 : index
    %c0_67 = arith.constant 0 : index
    %c32_68 = arith.constant 32 : index
    %66 = vector.load %arg9[%c0_65, %c1_66, %c0_67, %c32_68] : memref<2x8x8x144xf32, #tpu.memory_space<vmem>>, vector<2x7x7x16xf32>
    tpu.vector_store %arg9[%c0_65, %c1_66, %c0_67, %c32_68], %65 {strides = array<i32>} : memref<2x8x8x144xf32, #tpu.memory_space<vmem>>, vector<2x7x7x16xf32>,
    %67 = vector.extract_strided_slice %58 {offsets = [0, 0, 0, 0], sizes = [2, 8, 7, 16], strides = [1, 1, 1, 1]} : vector<2x8x8x16xf32> to vector<2x8x7x16xf32>
    %c0_69 = arith.constant 0 : index
    %c0_70 = arith.constant 0 : index
    %c1_71 = arith.constant 1 : index
    %c48 = arith.constant 48 : index
    %68 = vector.load %arg9[%c0_69, %c0_70, %c1_71, %c48] : memref<2x8x8x144xf32, #tpu.memory_space<vmem>>, vector<2x8x7x16xf32>
    tpu.vector_store %arg9[%c0_69, %c0_70, %c1_71, %c48], %67 {strides = array<i32>} : memref<2x8x8x144xf32, #tpu.memory_space<vmem>>, vector<2x8x7x16xf32>,
    %c0_72 = arith.constant 0 : index
    %c0_73 = arith.constant 0 : index
    %c0_74 = arith.constant 0 : index
    %c64 = arith.constant 64 : index
    %69 = vector.load %arg9[%c0_72, %c0_73, %c0_74, %c64] : memref<2x8x8x144xf32, #tpu.memory_space<vmem>>, vector<2x8x8x16xf32>
    tpu.vector_store %arg9[%c0_72, %c0_73, %c0_74, %c64], %58 {strides = array<i32>} : memref<2x8x8x144xf32, #tpu.memory_space<vmem>>, vector<2x8x8x16xf32>,
    %70 = vector.extract_strided_slice %58 {offsets = [0, 0, 1, 0], sizes = [2, 8, 7, 16], strides = [1, 1, 1, 1]} : vector<2x8x8x16xf32> to vector<2x8x7x16xf32>
    %c0_75 = arith.constant 0 : index
    %c0_76 = arith.constant 0 : index
    %c0_77 = arith.constant 0 : index
    %c80 = arith.constant 80 : index
    %71 = vector.load %arg9[%c0_75, %c0_76, %c0_77, %c80] : memref<2x8x8x144xf32, #tpu.memory_space<vmem>>, vector<2x8x7x16xf32>
    tpu.vector_store %arg9[%c0_75, %c0_76, %c0_77, %c80], %70 {strides = array<i32>} : memref<2x8x8x144xf32, #tpu.memory_space<vmem>>, vector<2x8x7x16xf32>,
    %72 = vector.extract_strided_slice %58 {offsets = [0, 1, 0, 0], sizes = [2, 7, 7, 16], strides = [1, 1, 1, 1]} : vector<2x8x8x16xf32> to vector<2x7x7x16xf32>
    %c0_78 = arith.constant 0 : index
    %c0_79 = arith.constant 0 : index
    %c1_80 = arith.constant 1 : index
    %c96 = arith.constant 96 : index
    %73 = vector.load %arg9[%c0_78, %c0_79, %c1_80, %c96] : memref<2x8x8x144xf32, #tpu.memory_space<vmem>>, vector<2x7x7x16xf32>
    tpu.vector_store %arg9[%c0_78, %c0_79, %c1_80, %c96], %72 {strides = array<i32>} : memref<2x8x8x144xf32, #tpu.memory_space<vmem>>, vector<2x7x7x16xf32>,
    %74 = vector.extract_strided_slice %58 {offsets = [0, 1, 0, 0], sizes = [2, 7, 8, 16], strides = [1, 1, 1, 1]} : vector<2x8x8x16xf32> to vector<2x7x8x16xf32>
    %c0_81 = arith.constant 0 : index
    %c0_82 = arith.constant 0 : index
    %c0_83 = arith.constant 0 : index
    %c112 = arith.constant 112 : index
    %75 = vector.load %arg9[%c0_81, %c0_82, %c0_83, %c112] : memref<2x8x8x144xf32, #tpu.memory_space<vmem>>, vector<2x7x8x16xf32>
    tpu.vector_store %arg9[%c0_81, %c0_82, %c0_83, %c112], %74 {strides = array<i32>} : memref<2x8x8x144xf32, #tpu.memory_space<vmem>>, vector<2x7x8x16xf32>,
    %76 = vector.extract_strided_slice %58 {offsets = [0, 1, 1, 0], sizes = [2, 7, 7, 16], strides = [1, 1, 1, 1]} : vector<2x8x8x16xf32> to vector<2x7x7x16xf32>
    %c0_84 = arith.constant 0 : index
    %c0_85 = arith.constant 0 : index
    %c0_86 = arith.constant 0 : index
    %c128 = arith.constant 128 : index
    %77 = vector.load %arg9[%c0_84, %c0_85, %c0_86, %c128] : memref<2x8x8x144xf32, #tpu.memory_space<vmem>>, vector<2x7x7x16xf32>
    tpu.vector_store %arg9[%c0_84, %c0_85, %c0_86, %c128], %76 {strides = array<i32>} : memref<2x8x8x144xf32, #tpu.memory_space<vmem>>, vector<2x7x7x16xf32>,
    %c0_87 = arith.constant 0 : index
    %c0_88 = arith.constant 0 : index
    %c0_89 = arith.constant 0 : index
    %c0_90 = arith.constant 0 : index
    %78 = vector.load %arg9[%c0_87, %c0_88, %c0_89, %c0_90] : memref<2x8x8x144xf32, #tpu.memory_space<vmem>>, vector<2x8x8x144xf32>
    %79 = vector.shape_cast %78 : vector<2x8x8x144xf32> to vector<128x144xf32>
    %c0_91 = arith.constant 0 : index
    %c0_92 = arith.constant 0 : index
    %80 = vector.load %arg4[%c0_91, %c0_92] : memref<144x16xf32, #tpu.memory_space<vmem>>, vector<144x16xf32>
    %cst_93 = arith.constant dense<0.000000e+00> : vector<128x16xf32>
    %81 = tpu.matmul %79, %80, %cst_93 {dimension_numbers = #tpu.dot_dimension_numbers<[1], [0], [0], [1], [0, 0, 1, 1], [], []>} : vector<128x144xf32>, vector<144x16xf32>, vector<128x16xf32> -> vector<128x16xf32>
    %cst_94 = arith.constant dense<0.000000e+00> : vector<16xf32>
    %82 = vector.multi_reduction <add>, %81, %cst_94 [0] : vector<128x16xf32> to vector<16xf32>
    %83 = vector.shape_cast %82 : vector<16xf32> to vector<1x16xf32>
    %cst_95 = arith.constant 1.280000e+02 : f32
    %84 = vector.broadcast %cst_95 : f32 to vector<1x16xf32>
    %85 = arith.divf %83, %84 : vector<1x16xf32>
    %86 = vector.broadcast %85 : vector<1x16xf32> to vector<128x16xf32>
    %87 = arith.subf %81, %86 : vector<128x16xf32>
    %88 = arith.mulf %87, %87 : vector<128x16xf32>
    %cst_96 = arith.constant dense<0.000000e+00> : vector<16xf32>
    %89 = vector.multi_reduction <add>, %88, %cst_96 [0] : vector<128x16xf32> to vector<16xf32>
    %90 = vector.shape_cast %89 : vector<16xf32> to vector<1x16xf32>
    %cst_97 = arith.constant 1.280000e+02 : f32
    %91 = vector.broadcast %cst_97 : f32 to vector<1x16xf32>
    %92 = arith.divf %90, %91 : vector<1x16xf32>
    %93 = vector.broadcast %85 : vector<1x16xf32> to vector<128x16xf32>
    %94 = arith.subf %81, %93 : vector<128x16xf32>
    %cst_98 = arith.constant 9.99999974E-6 : f32
    %95 = vector.broadcast %cst_98 : f32 to vector<1x16xf32>
    %96 = arith.addf %92, %95 : vector<1x16xf32>
    %97 = math.rsqrt %96 : vector<1x16xf32>
    %98 = vector.broadcast %97 : vector<1x16xf32> to vector<128x16xf32>
    %99 = arith.mulf %94, %98 : vector<128x16xf32>
    %c0_99 = arith.constant 0 : index
    %c0_100 = arith.constant 0 : index
    %100 = vector.load %arg5[%c0_99, %c0_100] : memref<1x16xf32, #tpu.memory_space<vmem>>, vector<1x16xf32>
    %101 = vector.broadcast %100 : vector<1x16xf32> to vector<128x16xf32>
    %102 = arith.mulf %99, %101 : vector<128x16xf32>
    %c0_101 = arith.constant 0 : index
    %c0_102 = arith.constant 0 : index
    %103 = vector.load %arg6[%c0_101, %c0_102] : memref<1x16xf32, #tpu.memory_space<vmem>>, vector<1x16xf32>
    %104 = vector.broadcast %103 : vector<1x16xf32> to vector<128x16xf32>
    %105 = arith.addf %102, %104 : vector<128x16xf32>
    %cst_103 = arith.constant 0.000000e+00 : f32
    %106 = vector.broadcast %cst_103 : f32 to vector<128x16xf32>
    %107 = arith.maximumf %105, %106 : vector<128x16xf32>
    %c0_104 = arith.constant 0 : index
    %c0_105 = arith.constant 0 : index
    %108 = vector.load %arg7[%c0_104, %c0_105] : memref<128x16xf32, #tpu.memory_space<vmem>>, vector<128x16xf32>
    tpu.vector_store %arg7[%c0_104, %c0_105], %107 {strides = array<i32>} : memref<128x16xf32, #tpu.memory_space<vmem>>, vector<128x16xf32>,
    return
  }
}

</mosaic_0001>

<llo_original>
// kernel: down_forward.1
$region0: #{down_forward.1}
  #allocation0 [shape = 'u32[]', space=smem, size = 0x4, offset = 0x4, fixed_abs, tag = 'smem constant byte address 0x4 - core index']
  #allocation1 [shape = 'u32[144,128]{1,0:T(1,128)}', space=vmem, size = 0x12000, scoped, tag = 'internal scratch']
  #allocation2 [shape = 'f32[2,8,8,36]{3,2,1,0:T(8,128)}', space=vmem, size = 0x10000, scoped, tag = 'scratch operand']
  #allocation3 [shape = 'f32[2,8,8,144]{3,2,1,0:T(8,128)}', space=vmem, size = 0x20000, scoped, tag = 'scratch operand']
  %s0 = inlined_call_operand.vmem [shape: f32[2,8,2,8,8], index: 0, kind: input, shape index: {}]
  %s1 = inlined_call_operand.vmem [shape: f32[36,16], index: 1, kind: input, shape index: {}]
  %s2 = inlined_call_operand.vmem [shape: f32[1,16], index: 2, kind: input, shape index: {}]
  %s3 = inlined_call_operand.vmem [shape: f32[1,16], index: 3, kind: input, shape index: {}]
  %s4 = inlined_call_operand.vmem [shape: f32[144,16], index: 4, kind: input, shape index: {}]
  %s5 = inlined_call_operand.vmem [shape: f32[1,16], index: 5, kind: input, shape index: {}]
  %s6 = inlined_call_operand.vmem [shape: f32[1,16], index: 6, kind: input, shape index: {}]
  %s7 = inlined_call_operand.hbm [shape: f32[128,16], index: 7, kind: output, shape index: {}]
  %s8 = sld [smem:[#allocation0]]
  $region38: #{down_forward.1} parent=0
    _
  %s10 = ssub.s32 1, %s8
  %s11 = scalar_select 0, %s10, %s8
  $region1: #{down_forward.1} parent=0
    #allocation4 [shape = 'u8[65536]{0}', space=vmem, size = 0x10000, scoped, tag = 'output window, operand 0, single buffered']
    #allocation5 [shape = 's32[1]{0}', space=sflag, size = 0x4, scoped, tag = 'scoped memory for down_forward.1']
    %12 = vsyncpa [#allocation5], 0
    // Predicated region
    $region2: #{down_forward.1} parent=1 // pred_check
      _
    $region3: #{down_forward.1} parent=1 // pred_check_branch
      %14 = sbr.rel (0) target = $region5
    $region4: #{down_forward.1} parent=1 // pred_region
      _
    $region5: #{down_forward.1} parent=1 // pred_fallthru
      _
    // Predicated region
    $region6: #{down_forward.1} parent=1 // pred_check
      _
    $region7: #{down_forward.1} parent=1 // pred_check_branch
      %16 = sbr.rel (0) target = $region9
    $region8: #{down_forward.1} parent=1 // pred_region
      _
    $region9: #{down_forward.1} parent=1 // pred_fallthru
      _
    // Predicated region
    $region10: #{down_forward.1} parent=1 // pred_check
      _
    $region11: #{down_forward.1} parent=1 // pred_check_branch
      %18 = sbr.rel (0) target = $region13
    $region12: #{down_forward.1} parent=1 // pred_region
      _
    $region13: #{down_forward.1} parent=1 // pred_fallthru
      _
    // Predicated region
    $region14: #{down_forward.1} parent=1 // pred_check
      _
    $region15: #{down_forward.1} parent=1 // pred_check_branch
      %20 = sbr.rel (0) target = $region17
    $region16: #{down_forward.1} parent=1 // pred_region
      _
    $region17: #{down_forward.1} parent=1 // pred_fallthru
      _
    // Predicated region
    $region18: #{down_forward.1} parent=1 // pred_check
      _
    $region19: #{down_forward.1} parent=1 // pred_check_branch
      %22 = sbr.rel (0) target = $region21
    $region20: #{down_forward.1} parent=1 // pred_region
      _
    $region21: #{down_forward.1} parent=1 // pred_fallthru
      _
    // Predicated region
    $region22: #{down_forward.1} parent=1 // pred_check
      _
    $region23: #{down_forward.1} parent=1 // pred_check_branch
      %24 = sbr.rel (0) target = $region25
    $region24: #{down_forward.1} parent=1 // pred_region
      _
    $region25: #{down_forward.1} parent=1 // pred_fallthru
      _
    // Predicated region
    $region26: #{down_forward.1} parent=1 // pred_check
      _
    $region27: #{down_forward.1} parent=1 // pred_check_branch
      %26 = sbr.rel (0) target = $region29
    $region28: #{down_forward.1} parent=1 // pred_region
      _
    $region29: #{down_forward.1} parent=1 // pred_fallthru
      _
    %v27 = vld [vmem:[%s0] sm:$0xff]
    %v28 = vld [vmem:[%s0 + $0x8] sm:$0xff]
    %v29 = vld [vmem:[%s0 + $0x10] sm:$0xff]
    %v30 = vld [vmem:[%s0 + $0x18] sm:$0xff]
    %v31 = vld [vmem:[%s0 + $0x20] sm:$0xff]
    %v32 = vld [vmem:[%s0 + $0x28] sm:$0xff]
    %v33 = vld [vmem:[%s0 + $0x30] sm:$0xff]
    %v34 = vld [vmem:[%s0 + $0x38] sm:$0xff]
    %v35 = vld [vmem:[%s0 + $0x40] sm:$0xff]
    %v36 = vld [vmem:[%s0 + $0x48] sm:$0xff]
    %v37 = vld [vmem:[%s0 + $0x50] sm:$0xff]
    %v38 = vld [vmem:[%s0 + $0x58] sm:$0xff]
    %v39 = vld [vmem:[%s0 + $0x60] sm:$0xff]
    %v40 = vld [vmem:[%s0 + $0x68] sm:$0xff]
    %v41 = vld [vmem:[%s0 + $0x70] sm:$0xff]
    %v42 = vld [vmem:[%s0 + $0x78] sm:$0xff]
    %v43 = vld [vmem:[%s0 + $0x80] sm:$0xff]
    %v44 = vld [vmem:[%s0 + $0x88] sm:$0xff]
    %v45 = vld [vmem:[%s0 + $0x90] sm:$0xff]
    %v46 = vld [vmem:[%s0 + $0x98] sm:$0xff]
    %v47 = vld [vmem:[%s0 + $0xa0] sm:$0xff]
    %v48 = vld [vmem:[%s0 + $0xa8] sm:$0xff]
    %v49 = vld [vmem:[%s0 + $0xb0] sm:$0xff]
    %v50 = vld [vmem:[%s0 + $0xb8] sm:$0xff]
    %v51 = vld [vmem:[%s0 + $0xc0] sm:$0xff]
    %v52 = vld [vmem:[%s0 + $0xc8] sm:$0xff]
    %v53 = vld [vmem:[%s0 + $0xd0] sm:$0xff]
    %v54 = vld [vmem:[%s0 + $0xd8] sm:$0xff]
    %v55 = vld [vmem:[%s0 + $0xe0] sm:$0xff]
    %v56 = vld [vmem:[%s0 + $0xe8] sm:$0xff]
    %v57 = vld [vmem:[%s0 + $0xf0] sm:$0xff]
    %v58 = vld [vmem:[%s0 + $0xf8] sm:$0xff]
    %v59 = vmax.f32 %v27, %v28
    %v60 = vmax.f32 %v29, %v30
    %v61 = vmax.f32 %v31, %v32
    %v62 = vmax.f32 %v33, %v34
    %v63 = vmax.f32 %v35, %v36
    %v64 = vmax.f32 %v37, %v38
    %v65 = vmax.f32 %v39, %v40
    %v66 = vmax.f32 %v41, %v42
    %v67 = vmax.f32 %v43, %v44
    %v68 = vmax.f32 %v45, %v46
    %v69 = vmax.f32 %v47, %v48
    %v70 = vmax.f32 %v49, %v50
    %v71 = vmax.f32 %v51, %v52
    %v72 = vmax.f32 %v53, %v54
    %v73 = vmax.f32 %v55, %v56
    %v74 = vmax.f32 %v57, %v58
    %91 = vrot.lane.b32.xlu0 %v59, 124
    %v92 = vpop.permute.xlu0 %91
    %93 = vrot.lane.b32.xlu0 %v60, 124
    %v94 = vpop.permute.xlu0 %93
    %95 = vrot.lane.b32.xlu0 %v61, 124
    %v96 = vpop.permute.xlu0 %95
    %97 = vrot.lane.b32.xlu0 %v62, 124
    %v98 = vpop.permute.xlu0 %97
    %99 = vrot.lane.b32.xlu0 %v63, 124
    %v100 = vpop.permute.xlu0 %99
    %101 = vrot.lane.b32.xlu0 %v64, 124
    %v102 = vpop.permute.xlu0 %101
    %103 = vrot.lane.b32.xlu0 %v65, 124
    %v104 = vpop.permute.xlu0 %103
    %105 = vrot.lane.b32.xlu0 %v66, 124
    %v106 = vpop.permute.xlu0 %105
    %107 = vrot.lane.b32.xlu0 %v67, 124
    %v108 = vpop.permute.xlu0 %107
    %109 = vrot.lane.b32.xlu0 %v68, 124
    %v110 = vpop.permute.xlu0 %109
    %111 = vrot.lane.b32.xlu0 %v69, 124
    %v112 = vpop.permute.xlu0 %111
    %113 = vrot.lane.b32.xlu0 %v70, 124
    %v114 = vpop.permute.xlu0 %113
    %115 = vrot.lane.b32.xlu0 %v71, 124
    %v116 = vpop.permute.xlu0 %115
    %117 = vrot.lane.b32.xlu0 %v72, 124
    %v118 = vpop.permute.xlu0 %117
    %119 = vrot.lane.b32.xlu0 %v73, 124
    %v120 = vpop.permute.xlu0 %119
    %121 = vrot.lane.b32.xlu0 %v74, 124
    %v122 = vpop.permute.xlu0 %121
    %v139 = vmax.f32 %v59, %v92
    %v140 = vmax.f32 %v60, %v94
    %v141 = vmax.f32 %v61, %v96
    %v142 = vmax.f32 %v62, %v98
    %v143 = vmax.f32 %v63, %v100
    %v144 = vmax.f32 %v64, %v102
    %v145 = vmax.f32 %v65, %v104
    %v146 = vmax.f32 %v66, %v106
    %v147 = vmax.f32 %v67, %v108
    %v148 = vmax.f32 %v68, %v110
    %v149 = vmax.f32 %v69, %v112
    %v150 = vmax.f32 %v70, %v114
    %v151 = vmax.f32 %v71, %v116
    %v152 = vmax.f32 %v72, %v118
    %v153 = vmax.f32 %v73, %v120
    %v154 = vmax.f32 %v74, %v122
    %vm155 = vcmask 293888
    %156 = vst.msk [vmem:[#allocation2] sm:$0xff] %vm155, 0.0
    %157 = vst.msk [vmem:[#allocation2 + $0x8] sm:$0xff] %vm155, 0.0
    %158 = vst.msk [vmem:[#allocation2 + $0x10] sm:$0xff] %vm155, 0.0
    %159 = vst.msk [vmem:[#allocation2 + $0x18] sm:$0xff] %vm155, 0.0
    %160 = vst.msk [vmem:[#allocation2 + $0x20] sm:$0xff] %vm155, 0.0
    %161 = vst.msk [vmem:[#allocation2 + $0x28] sm:$0xff] %vm155, 0.0
    %162 = vst.msk [vmem:[#allocation2 + $0x30] sm:$0xff] %vm155, 0.0
    %163 = vst.msk [vmem:[#allocation2 + $0x38] sm:$0xff] %vm155, 0.0
    %164 = vst.msk [vmem:[#allocation2 + $0x40] sm:$0xff] %vm155, 0.0
    %165 = vst.msk [vmem:[#allocation2 + $0x48] sm:$0xff] %vm155, 0.0
    %166 = vst.msk [vmem:[#allocation2 + $0x50] sm:$0xff] %vm155, 0.0
    %167 = vst.msk [vmem:[#allocation2 + $0x58] sm:$0xff] %vm155, 0.0
    %168 = vst.msk [vmem:[#allocation2 + $0x60] sm:$0xff] %vm155, 0.0
    %169 = vst.msk [vmem:[#allocation2 + $0x68] sm:$0xff] %vm155, 0.0
    %170 = vst.msk [vmem:[#allocation2 + $0x70] sm:$0xff] %vm155, 0.0
    %171 = vst.msk [vmem:[#allocation2 + $0x78] sm:$0xff] %vm155, 0.0
    %s172 = scalar_lea.vmem [#allocation2], 8
    %vm173 = vcmask 30720
    %174 = vst.msk [vmem:[%s172 + $0x1] sm:$0x7f] %vm173, %v139
    %175 = vst.msk [vmem:[%s172 + $0x9] sm:$0x7f] %vm173, %v140
    %176 = vst.msk [vmem:[%s172 + $0x11] sm:$0x7f] %vm173, %v141
    %177 = vst.msk [vmem:[%s172 + $0x19] sm:$0x7f] %vm173, %v142
    %178 = vst.msk [vmem:[%s172 + $0x21] sm:$0x7f] %vm173, %v143
    %179 = vst.msk [vmem:[%s172 + $0x29] sm:$0x7f] %vm173, %v144
    %180 = vst.msk [vmem:[%s172 + $0x31] sm:$0x7f] %vm173, %v145
    %181 = vst.msk [vmem:[%s172 + $0x41] sm:$0x7f] %vm173, %v147
    %182 = vst.msk [vmem:[%s172 + $0x49] sm:$0x7f] %vm173, %v148
    %183 = vst.msk [vmem:[%s172 + $0x51] sm:$0x7f] %vm173, %v149
    %184 = vst.msk [vmem:[%s172 + $0x59] sm:$0x7f] %vm173, %v150
    %185 = vst.msk [vmem:[%s172 + $0x61] sm:$0x7f] %vm173, %v151
    %186 = vst.msk [vmem:[%s172 + $0x69] sm:$0x7f] %vm173, %v152
    %187 = vst.msk [vmem:[%s172 + $0x71] sm:$0x7f] %vm173, %v153
    %202 = vrot.lane.b32.xlu0 %v139, 4
    %v203 = vpop.permute.xlu0 %202
    %204 = vrot.lane.b32.xlu0 %v140, 4
    %v205 = vpop.permute.xlu0 %204
    %206 = vrot.lane.b32.xlu0 %v141, 4
    %v207 = vpop.permute.xlu0 %206
    %208 = vrot.lane.b32.xlu0 %v142, 4
    %v209 = vpop.permute.xlu0 %208
    %210 = vrot.lane.b32.xlu0 %v143, 4
    %v211 = vpop.permute.xlu0 %210
    %212 = vrot.lane.b32.xlu0 %v144, 4
    %v213 = vpop.permute.xlu0 %212
    %214 = vrot.lane.b32.xlu0 %v145, 4
    %v215 = vpop.permute.xlu0 %214
    %216 = vrot.lane.b32.xlu0 %v147, 4
    %v217 = vpop.permute.xlu0 %216
    %218 = vrot.lane.b32.xlu0 %v148, 4
    %v219 = vpop.permute.xlu0 %218
    %220 = vrot.lane.b32.xlu0 %v149, 4
    %v221 = vpop.permute.xlu0 %220
    %222 = vrot.lane.b32.xlu0 %v150, 4
    %v223 = vpop.permute.xlu0 %222
    %224 = vrot.lane.b32.xlu0 %v151, 4
    %v225 = vpop.permute.xlu0 %224
    %226 = vrot.lane.b32.xlu0 %v152, 4
    %v227 = vpop.permute.xlu0 %226
    %228 = vrot.lane.b32.xlu0 %v153, 4
    %v229 = vpop.permute.xlu0 %228
    %vm244 = vcmask 64544
    %245 = vst.msk [vmem:[%s172] sm:$0xff] %vm244, %v203
    %246 = vst.msk [vmem:[%s172 + $0x8] sm:$0xff] %vm244, %v205
    %247 = vst.msk [vmem:[%s172 + $0x10] sm:$0xff] %vm244, %v207
    %248 = vst.msk [vmem:[%s172 + $0x18] sm:$0xff] %vm244, %v209
    %249 = vst.msk [vmem:[%s172 + $0x20] sm:$0xff] %vm244, %v211
    %250 = vst.msk [vmem:[%s172 + $0x28] sm:$0xff] %vm244, %v213
    %251 = vst.msk [vmem:[%s172 + $0x30] sm:$0xff] %vm244, %v215
    %252 = vst.msk [vmem:[%s172 + $0x40] sm:$0xff] %vm244, %v217
    %253 = vst.msk [vmem:[%s172 + $0x48] sm:$0xff] %vm244, %v219
    %254 = vst.msk [vmem:[%s172 + $0x50] sm:$0xff] %vm244, %v221
    %255 = vst.msk [vmem:[%s172 + $0x58] sm:$0xff] %vm244, %v223
    %256 = vst.msk [vmem:[%s172 + $0x60] sm:$0xff] %vm244, %v225
    %257 = vst.msk [vmem:[%s172 + $0x68] sm:$0xff] %vm244, %v227
    %258 = vst.msk [vmem:[%s172 + $0x70] sm:$0xff] %vm244, %v229
    %259 = vrot.lane.b32.xlu0 %v139, 8
    %v260 = vpop.permute.xlu0 %259
    %261 = vrot.lane.b32.xlu0 %v140, 8
    %v262 = vpop.permute.xlu0 %261
    %263 = vrot.lane.b32.xlu0 %v141, 8
    %v264 = vpop.permute.xlu0 %263
    %265 = vrot.lane.b32.xlu0 %v142, 8
    %v266 = vpop.permute.xlu0 %265
    %267 = vrot.lane.b32.xlu0 %v143, 8
    %v268 = vpop.permute.xlu0 %267
    %269 = vrot.lane.b32.xlu0 %v144, 8
    %v270 = vpop.permute.xlu0 %269
    %271 = vrot.lane.b32.xlu0 %v145, 8
    %v272 = vpop.permute.xlu0 %271
    %273 = vrot.lane.b32.xlu0 %v147, 8
    %v274 = vpop.permute.xlu0 %273
    %275 = vrot.lane.b32.xlu0 %v148, 8
    %v276 = vpop.permute.xlu0 %275
    %277 = vrot.lane.b32.xlu0 %v149, 8
    %v278 = vpop.permute.xlu0 %277
    %279 = vrot.lane.b32.xlu0 %v150, 8
    %v280 = vpop.permute.xlu0 %279
    %281 = vrot.lane.b32.xlu0 %v151, 8
    %v282 = vpop.permute.xlu0 %281
    %283 = vrot.lane.b32.xlu0 %v152, 8
    %v284 = vpop.permute.xlu0 %283
    %285 = vrot.lane.b32.xlu0 %v153, 8
    %v286 = vpop.permute.xlu0 %285
    %vm301 = vcmask 97345
    %302 = vst.msk [vmem:[%s172 - $0x1] sm:$0xfe] %vm301, %v260
    %303 = vst.msk [vmem:[%s172 + $0x7] sm:$0xfe] %vm301, %v262
    %304 = vst.msk [vmem:[%s172 + $0xf] sm:$0xfe] %vm301, %v264
    %305 = vst.msk [vmem:[%s172 + $0x17] sm:$0xfe] %vm301, %v266
    %306 = vst.msk [vmem:[%s172 + $0x1f] sm:$0xfe] %vm301, %v268
    %307 = vst.msk [vmem:[%s172 + $0x27] sm:$0xfe] %vm301, %v270
    %308 = vst.msk [vmem:[%s172 + $0x2f] sm:$0xfe] %vm301, %v272
    %309 = vst.msk [vmem:[%s172 + $0x3f] sm:$0xfe] %vm301, %v274
    %310 = vst.msk [vmem:[%s172 + $0x47] sm:$0xfe] %vm301, %v276
    %311 = vst.msk [vmem:[%s172 + $0x4f] sm:$0xfe] %vm301, %v278
    %312 = vst.msk [vmem:[%s172 + $0x57] sm:$0xfe] %vm301, %v280
    %313 = vst.msk [vmem:[%s172 + $0x5f] sm:$0xfe] %vm301, %v282
    %314 = vst.msk [vmem:[%s172 + $0x67] sm:$0xfe] %vm301, %v284
    %315 = vst.msk [vmem:[%s172 + $0x6f] sm:$0xfe] %vm301, %v286
    %318 = vrot.lane.b32.xlu0 %v139, 12
    %v319 = vpop.permute.xlu0 %318
    %320 = vrot.lane.b32.xlu0 %v140, 12
    %v321 = vpop.permute.xlu0 %320
    %322 = vrot.lane.b32.xlu0 %v141, 12
    %v323 = vpop.permute.xlu0 %322
    %324 = vrot.lane.b32.xlu0 %v142, 12
    %v325 = vpop.permute.xlu0 %324
    %326 = vrot.lane.b32.xlu0 %v143, 12
    %v327 = vpop.permute.xlu0 %326
    %328 = vrot.lane.b32.xlu0 %v144, 12
    %v329 = vpop.permute.xlu0 %328
    %330 = vrot.lane.b32.xlu0 %v145, 12
    %v331 = vpop.permute.xlu0 %330
    %332 = vrot.lane.b32.xlu0 %v146, 12
    %v333 = vpop.permute.xlu0 %332
    %334 = vrot.lane.b32.xlu0 %v147, 12
    %v335 = vpop.permute.xlu0 %334
    %336 = vrot.lane.b32.xlu0 %v148, 12
    %v337 = vpop.permute.xlu0 %336
    %338 = vrot.lane.b32.xlu0 %v149, 12
    %v339 = vpop.permute.xlu0 %338
    %340 = vrot.lane.b32.xlu0 %v150, 12
    %v341 = vpop.permute.xlu0 %340
    %342 = vrot.lane.b32.xlu0 %v151, 12
    %v343 = vpop.permute.xlu0 %342
    %344 = vrot.lane.b32.xlu0 %v152, 12
    %v345 = vpop.permute.xlu0 %344
    %346 = vrot.lane.b32.xlu0 %v153, 12
    %v347 = vpop.permute.xlu0 %346
    %348 = vrot.lane.b32.xlu0 %v154, 12
    %v349 = vpop.permute.xlu0 %348
    %vm366 = vcmask 129120
    %367 = vst.msk [vmem:[#allocation2 + $0x1] sm:$0x7f] %vm366, %v319
    %368 = vst.msk [vmem:[#allocation2 + $0x9] sm:$0x7f] %vm366, %v321
    %369 = vst.msk [vmem:[#allocation2 + $0x11] sm:$0x7f] %vm366, %v323
    %370 = vst.msk [vmem:[#allocation2 + $0x19] sm:$0x7f] %vm366, %v325
    %371 = vst.msk [vmem:[#allocation2 + $0x21] sm:$0x7f] %vm366, %v327
    %372 = vst.msk [vmem:[#allocation2 + $0x29] sm:$0x7f] %vm366, %v329
    %373 = vst.msk [vmem:[#allocation2 + $0x31] sm:$0x7f] %vm366, %v331
    %374 = vst.msk [vmem:[#allocation2 + $0x39] sm:$0x7f] %vm366, %v333
    %375 = vst.msk [vmem:[#allocation2 + $0x41] sm:$0x7f] %vm366, %v335
    %376 = vst.msk [vmem:[#allocation2 + $0x49] sm:$0x7f] %vm366, %v337
    %377 = vst.msk [vmem:[#allocation2 + $0x51] sm:$0x7f] %vm366, %v339
    %378 = vst.msk [vmem:[#allocation2 + $0x59] sm:$0x7f] %vm366, %v341
    %379 = vst.msk [vmem:[#allocation2 + $0x61] sm:$0x7f] %vm366, %v343
    %380 = vst.msk [vmem:[#allocation2 + $0x69] sm:$0x7f] %vm366, %v345
    %381 = vst.msk [vmem:[#allocation2 + $0x71] sm:$0x7f] %vm366, %v347
    %382 = vst.msk [vmem:[#allocation2 + $0x79] sm:$0x7f] %vm366, %v349
    %383 = vrot.lane.b32.xlu0 %v139, 16
    %v384 = vpop.permute.xlu0 %383
    %385 = vrot.lane.b32.xlu0 %v140, 16
    %v386 = vpop.permute.xlu0 %385
    %387 = vrot.lane.b32.xlu0 %v141, 16
    %v388 = vpop.permute.xlu0 %387
    %389 = vrot.lane.b32.xlu0 %v142, 16
    %v390 = vpop.permute.xlu0 %389
    %391 = vrot.lane.b32.xlu0 %v143, 16
    %v392 = vpop.permute.xlu0 %391
    %393 = vrot.lane.b32.xlu0 %v144, 16
    %v394 = vpop.permute.xlu0 %393
    %395 = vrot.lane.b32.xlu0 %v145, 16
    %v396 = vpop.permute.xlu0 %395
    %397 = vrot.lane.b32.xlu0 %v146, 16
    %v398 = vpop.permute.xlu0 %397
    %399 = vrot.lane.b32.xlu0 %v147, 16
    %v400 = vpop.permute.xlu0 %399
    %401 = vrot.lane.b32.xlu0 %v148, 16
    %v402 = vpop.permute.xlu0 %401
    %403 = vrot.lane.b32.xlu0 %v149, 16
    %v404 = vpop.permute.xlu0 %403
    %405 = vrot.lane.b32.xlu0 %v150, 16
    %v406 = vpop.permute.xlu0 %405
    %407 = vrot.lane.b32.xlu0 %v151, 16
    %v408 = vpop.permute.xlu0 %407
    %409 = vrot.lane.b32.xlu0 %v152, 16
    %v410 = vpop.permute.xlu0 %409
    %411 = vrot.lane.b32.xlu0 %v153, 16
    %v412 = vpop.permute.xlu0 %411
    %413 = vrot.lane.b32.xlu0 %v154, 16
    %v414 = vpop.permute.xlu0 %413
    %vm431 = vcmask 162944
    %432 = vst.msk [vmem:[#allocation2] sm:$0xff] %vm431, %v384
    %433 = vst.msk [vmem:[#allocation2 + $0x8] sm:$0xff] %vm431, %v386
    %434 = vst.msk [vmem:[#allocation2 + $0x10] sm:$0xff] %vm431, %v388
    %435 = vst.msk [vmem:[#allocation2 + $0x18] sm:$0xff] %vm431, %v390
    %436 = vst.msk [vmem:[#allocation2 + $0x20] sm:$0xff] %vm431, %v392
    %437 = vst.msk [vmem:[#allocation2 + $0x28] sm:$0xff] %vm431, %v394
    %438 = vst.msk [vmem:[#allocation2 + $0x30] sm:$0xff] %vm431, %v396
    %439 = vst.msk [vmem:[#allocation2 + $0x38] sm:$0xff] %vm431, %v398
    %440 = vst.msk [vmem:[#allocation2 + $0x40] sm:$0xff] %vm431, %v400
    %441 = vst.msk [vmem:[#allocation2 + $0x48] sm:$0xff] %vm431, %v402
    %442 = vst.msk [vmem:[#allocation2 + $0x50] sm:$0xff] %vm431, %v404
    %443 = vst.msk [vmem:[#allocation2 + $0x58] sm:$0xff] %vm431, %v406
    %444 = vst.msk [vmem:[#allocation2 + $0x60] sm:$0xff] %vm431, %v408
    %445 = vst.msk [vmem:[#allocation2 + $0x68] sm:$0xff] %vm431, %v410
    %446 = vst.msk [vmem:[#allocation2 + $0x70] sm:$0xff] %vm431, %v412
    %447 = vst.msk [vmem:[#allocation2 + $0x78] sm:$0xff] %vm431, %v414
    %448 = vrot.lane.b32.xlu0 %v139, 20
    %v449 = vpop.permute.xlu0 %448
    %450 = vrot.lane.b32.xlu0 %v140, 20
    %v451 = vpop.permute.xlu0 %450
    %452 = vrot.lane.b32.xlu0 %v141, 20
    %v453 = vpop.permute.xlu0 %452
    %454 = vrot.lane.b32.xlu0 %v142, 20
    %v455 = vpop.permute.xlu0 %454
    %456 = vrot.lane.b32.xlu0 %v143, 20
    %v457 = vpop.permute.xlu0 %456
    %458 = vrot.lane.b32.xlu0 %v144, 20
    %v459 = vpop.permute.xlu0 %458
    %460 = vrot.lane.b32.xlu0 %v145, 20
    %v461 = vpop.permute.xlu0 %460
    %462 = vrot.lane.b32.xlu0 %v146, 20
    %v463 = vpop.permute.xlu0 %462
    %464 = vrot.lane.b32.xlu0 %v147, 20
    %v465 = vpop.permute.xlu0 %464
    %466 = vrot.lane.b32.xlu0 %v148, 20
    %v467 = vpop.permute.xlu0 %466
    %468 = vrot.lane.b32.xlu0 %v149, 20
    %v469 = vpop.permute.xlu0 %468
    %470 = vrot.lane.b32.xlu0 %v150, 20
    %v471 = vpop.permute.xlu0 %470
    %472 = vrot.lane.b32.xlu0 %v151, 20
    %v473 = vpop.permute.xlu0 %472
    %474 = vrot.lane.b32.xlu0 %v152, 20
    %v475 = vpop.permute.xlu0 %474
    %476 = vrot.lane.b32.xlu0 %v153, 20
    %v477 = vpop.permute.xlu0 %476
    %478 = vrot.lane.b32.xlu0 %v154, 20
    %v479 = vpop.permute.xlu0 %478
    %vm496 = vcmask 195745
    %497 = vst.msk [vmem:[#allocation2 - $0x1] sm:$0xfe] %vm496, %v449
    %498 = vst.msk [vmem:[#allocation2 + $0x7] sm:$0xfe] %vm496, %v451
    %499 = vst.msk [vmem:[#allocation2 + $0xf] sm:$0xfe] %vm496, %v453
    %500 = vst.msk [vmem:[#allocation2 + $0x17] sm:$0xfe] %vm496, %v455
    %501 = vst.msk [vmem:[#allocation2 + $0x1f] sm:$0xfe] %vm496, %v457
    %502 = vst.msk [vmem:[#allocation2 + $0x27] sm:$0xfe] %vm496, %v459
    %503 = vst.msk [vmem:[#allocation2 + $0x2f] sm:$0xfe] %vm496, %v461
    %504 = vst.msk [vmem:[#allocation2 + $0x37] sm:$0xfe] %vm496, %v463
    %505 = vst.msk [vmem:[#allocation2 + $0x3f] sm:$0xfe] %vm496, %v465
    %506 = vst.msk [vmem:[#allocation2 + $0x47] sm:$0xfe] %vm496, %v467
    %507 = vst.msk [vmem:[#allocation2 + $0x4f] sm:$0xfe] %vm496, %v469
    %508 = vst.msk [vmem:[#allocation2 + $0x57] sm:$0xfe] %vm496, %v471
    %509 = vst.msk [vmem:[#allocation2 + $0x5f] sm:$0xfe] %vm496, %v473
    %510 = vst.msk [vmem:[#allocation2 + $0x67] sm:$0xfe] %vm496, %v475
    %511 = vst.msk [vmem:[#allocation2 + $0x6f] sm:$0xfe] %vm496, %v477
    %512 = vst.msk [vmem:[#allocation2 + $0x77] sm:$0xfe] %vm496, %v479
    %513 = vrot.lane.b32.xlu0 %v140, 24
    %v514 = vpop.permute.xlu0 %513
    %515 = vrot.lane.b32.xlu0 %v141, 24
    %v516 = vpop.permute.xlu0 %515
    %517 = vrot.lane.b32.xlu0 %v142, 24
    %v518 = vpop.permute.xlu0 %517
    %519 = vrot.lane.b32.xlu0 %v143, 24
    %v520 = vpop.permute.xlu0 %519
    %521 = vrot.lane.b32.xlu0 %v144, 24
    %v522 = vpop.permute.xlu0 %521
    %523 = vrot.lane.b32.xlu0 %v145, 24
    %v524 = vpop.permute.xlu0 %523
    %525 = vrot.lane.b32.xlu0 %v146, 24
    %v526 = vpop.permute.xlu0 %525
    %527 = vrot.lane.b32.xlu0 %v148, 24
    %v528 = vpop.permute.xlu0 %527
    %529 = vrot.lane.b32.xlu0 %v149, 24
    %v530 = vpop.permute.xlu0 %529
    %531 = vrot.lane.b32.xlu0 %v150, 24
    %v532 = vpop.permute.xlu0 %531
    %533 = vrot.lane.b32.xlu0 %v151, 24
    %v534 = vpop.permute.xlu0 %533
    %535 = vrot.lane.b32.xlu0 %v152, 24
    %v536 = vpop.permute.xlu0 %535
    %537 = vrot.lane.b32.xlu0 %v153, 24
    %v538 = vpop.permute.xlu0 %537
    %539 = vrot.lane.b32.xlu0 %v154, 24
    %v540 = vpop.permute.xlu0 %539
    %vm555 = vcmask 227520
    %556 = vst.msk [vmem:[#allocation2 + $0x1] sm:$0x7f] %vm555, %v514
    %557 = vst.msk [vmem:[#allocation2 + $0x9] sm:$0x7f] %vm555, %v516
    %558 = vst.msk [vmem:[#allocation2 + $0x11] sm:$0x7f] %vm555, %v518
    %559 = vst.msk [vmem:[#allocation2 + $0x19] sm:$0x7f] %vm555, %v520
    %560 = vst.msk [vmem:[#allocation2 + $0x21] sm:$0x7f] %vm555, %v522
    %561 = vst.msk [vmem:[#allocation2 + $0x29] sm:$0x7f] %vm555, %v524
    %562 = vst.msk [vmem:[#allocation2 + $0x31] sm:$0x7f] %vm555, %v526
    %563 = vst.msk [vmem:[#allocation2 + $0x41] sm:$0x7f] %vm555, %v528
    %564 = vst.msk [vmem:[#allocation2 + $0x49] sm:$0x7f] %vm555, %v530
    %565 = vst.msk [vmem:[#allocation2 + $0x51] sm:$0x7f] %vm555, %v532
    %566 = vst.msk [vmem:[#allocation2 + $0x59] sm:$0x7f] %vm555, %v534
    %567 = vst.msk [vmem:[#allocation2 + $0x61] sm:$0x7f] %vm555, %v536
    %568 = vst.msk [vmem:[#allocation2 + $0x69] sm:$0x7f] %vm555, %v538
    %569 = vst.msk [vmem:[#allocation2 + $0x71] sm:$0x7f] %vm555, %v540
    %570 = vrot.lane.b32.xlu0 %v140, 28
    %v571 = vpop.permute.xlu0 %570
    %572 = vrot.lane.b32.xlu0 %v141, 28
    %v573 = vpop.permute.xlu0 %572
    %574 = vrot.lane.b32.xlu0 %v142, 28
    %v575 = vpop.permute.xlu0 %574
    %576 = vrot.lane.b32.xlu0 %v143, 28
    %v577 = vpop.permute.xlu0 %576
    %578 = vrot.lane.b32.xlu0 %v144, 28
    %v579 = vpop.permute.xlu0 %578
    %580 = vrot.lane.b32.xlu0 %v145, 28
    %v581 = vpop.permute.xlu0 %580
    %582 = vrot.lane.b32.xlu0 %v146, 28
    %v583 = vpop.permute.xlu0 %582
    %584 = vrot.lane.b32.xlu0 %v148, 28
    %v585 = vpop.permute.xlu0 %584
    %586 = vrot.lane.b32.xlu0 %v149, 28
    %v587 = vpop.permute.xlu0 %586
    %588 = vrot.lane.b32.xlu0 %v150, 28
    %v589 = vpop.permute.xlu0 %588
    %590 = vrot.lane.b32.xlu0 %v151, 28
    %v591 = vpop.permute.xlu0 %590
    %592 = vrot.lane.b32.xlu0 %v152, 28
    %v593 = vpop.permute.xlu0 %592
    %594 = vrot.lane.b32.xlu0 %v153, 28
    %v595 = vpop.permute.xlu0 %594
    %596 = vrot.lane.b32.xlu0 %v154, 28
    %v597 = vpop.permute.xlu0 %596
    %vm612 = vcmask 261344
    %613 = vst.msk [vmem:[#allocation2] sm:$0xff] %vm612, %v571
    %614 = vst.msk [vmem:[#allocation2 + $0x8] sm:$0xff] %vm612, %v573
    %615 = vst.msk [vmem:[#allocation2 + $0x10] sm:$0xff] %vm612, %v575
    %616 = vst.msk [vmem:[#allocation2 + $0x18] sm:$0xff] %vm612, %v577
    %617 = vst.msk [vmem:[#allocation2 + $0x20] sm:$0xff] %vm612, %v579
    %618 = vst.msk [vmem:[#allocation2 + $0x28] sm:$0xff] %vm612, %v581
    %619 = vst.msk [vmem:[#allocation2 + $0x30] sm:$0xff] %vm612, %v583
    %620 = vst.msk [vmem:[#allocation2 + $0x40] sm:$0xff] %vm612, %v585
    %621 = vst.msk [vmem:[#allocation2 + $0x48] sm:$0xff] %vm612, %v587
    %622 = vst.msk [vmem:[#allocation2 + $0x50] sm:$0xff] %vm612, %v589
    %623 = vst.msk [vmem:[#allocation2 + $0x58] sm:$0xff] %vm612, %v591
    %624 = vst.msk [vmem:[#allocation2 + $0x60] sm:$0xff] %vm612, %v593
    %625 = vst.msk [vmem:[#allocation2 + $0x68] sm:$0xff] %vm612, %v595
    %626 = vst.msk [vmem:[#allocation2 + $0x70] sm:$0xff] %vm612, %v597
    %627 = vrot.lane.b32.xlu0 %v140, 32
    %v628 = vpop.permute.xlu0 %627
    %629 = vrot.lane.b32.xlu0 %v141, 32
    %v630 = vpop.permute.xlu0 %629
    %631 = vrot.lane.b32.xlu0 %v142, 32
    %v632 = vpop.permute.xlu0 %631
    %633 = vrot.lane.b32.xlu0 %v143, 32
    %v634 = vpop.permute.xlu0 %633
    %635 = vrot.lane.b32.xlu0 %v144, 32
    %v636 = vpop.permute.xlu0 %635
    %637 = vrot.lane.b32.xlu0 %v145, 32
    %v638 = vpop.permute.xlu0 %637
    %639 = vrot.lane.b32.xlu0 %v146, 32
    %v640 = vpop.permute.xlu0 %639
    %641 = vrot.lane.b32.xlu0 %v148, 32
    %v642 = vpop.permute.xlu0 %641
    %643 = vrot.lane.b32.xlu0 %v149, 32
    %v644 = vpop.permute.xlu0 %643
    %645 = vrot.lane.b32.xlu0 %v150, 32
    %v646 = vpop.permute.xlu0 %645
    %647 = vrot.lane.b32.xlu0 %v151, 32
    %v648 = vpop.permute.xlu0 %647
    %649 = vrot.lane.b32.xlu0 %v152, 32
    %v650 = vpop.permute.xlu0 %649
    %651 = vrot.lane.b32.xlu0 %v153, 32
    %v652 = vpop.permute.xlu0 %651
    %653 = vrot.lane.b32.xlu0 %v154, 32
    %v654 = vpop.permute.xlu0 %653
    %vm669 = vcmask 294145
    %670 = vst.msk [vmem:[#allocation2 - $0x1] sm:$0xfe] %vm669, %v628
    %671 = vst.msk [vmem:[#allocation2 + $0x7] sm:$0xfe] %vm669, %v630
    %672 = vst.msk [vmem:[#allocation2 + $0xf] sm:$0xfe] %vm669, %v632
    %673 = vst.msk [vmem:[#allocation2 + $0x17] sm:$0xfe] %vm669, %v634
    %674 = vst.msk [vmem:[#allocation2 + $0x1f] sm:$0xfe] %vm669, %v636
    %675 = vst.msk [vmem:[#allocation2 + $0x27] sm:$0xfe] %vm669, %v638
    %676 = vst.msk [vmem:[#allocation2 + $0x2f] sm:$0xfe] %vm669, %v640
    %677 = vst.msk [vmem:[#allocation2 + $0x3f] sm:$0xfe] %vm669, %v642
    %678 = vst.msk [vmem:[#allocation2 + $0x47] sm:$0xfe] %vm669, %v644
    %679 = vst.msk [vmem:[#allocation2 + $0x4f] sm:$0xfe] %vm669, %v646
    %680 = vst.msk [vmem:[#allocation2 + $0x57] sm:$0xfe] %vm669, %v648
    %681 = vst.msk [vmem:[#allocation2 + $0x5f] sm:$0xfe] %vm669, %v650
    %682 = vst.msk [vmem:[#allocation2 + $0x67] sm:$0xfe] %vm669, %v652
    %683 = vst.msk [vmem:[#allocation2 + $0x6f] sm:$0xfe] %vm669, %v654
    %v684 = vld [vmem:[#allocation2] sm:$0xff]
    %v685 = vld [vmem:[#allocation2 + $0x8] sm:$0xff]
    %v686 = vld [vmem:[#allocation2 + $0x10] sm:$0xff]
    %v687 = vld [vmem:[#allocation2 + $0x18] sm:$0xff]
    %v688 = vld [vmem:[#allocation2 + $0x20] sm:$0xff]
    %v689 = vld [vmem:[#allocation2 + $0x28] sm:$0xff]
    %v690 = vld [vmem:[#allocation2 + $0x30] sm:$0xff]
    %v691 = vld [vmem:[#allocation2 + $0x38] sm:$0xff]
    %v692 = vld [vmem:[#allocation2 + $0x40] sm:$0xff]
    %v693 = vld [vmem:[#allocation2 + $0x48] sm:$0xff]
    %v694 = vld [vmem:[#allocation2 + $0x50] sm:$0xff]
    %v695 = vld [vmem:[#allocation2 + $0x58] sm:$0xff]
    %v696 = vld [vmem:[#allocation2 + $0x60] sm:$0xff]
    %v697 = vld [vmem:[#allocation2 + $0x68] sm:$0xff]
    %v698 = vld [vmem:[#allocation2 + $0x70] sm:$0xff]
    %v699 = vld [vmem:[#allocation2 + $0x78] sm:$0xff]
    %v700 = vld [vmem:[%s1] sm:$0xff]
    %v701 = vld [vmem:[%s1 + $0x8] sm:$0xff]
    %v702 = vld [vmem:[%s1 + $0x10] sm:$0xff]
    %v703 = vld [vmem:[%s1 + $0x18] sm:$0xff]
    %v704 = vld [vmem:[%s1 + $0x20] sm:$0xf]
    %v706 = vsel %vm155, %v684, 0
    %v709 = vsel %vm155, %v685, 0
    %v712 = vsel %vm155, %v686, 0
    %v715 = vsel %vm155, %v687, 0
    %v718 = vsel %vm155, %v688, 0
    %v721 = vsel %vm155, %v689, 0
    %v724 = vsel %vm155, %v690, 0
    %v727 = vsel %vm155, %v691, 0
    %v730 = vsel %vm155, %v692, 0
    %v733 = vsel %vm155, %v693, 0
    %v736 = vsel %vm155, %v694, 0
    %v739 = vsel %vm155, %v695, 0
    %v742 = vsel %vm155, %v696, 0
    %v745 = vsel %vm155, %v697, 0
    %v748 = vsel %vm155, %v698, 0
    %v751 = vsel %vm155, %v699, 0
    %vm753 = vcmask 1043456
    %v755 = vsel %vm753, %v704, 0
    %757 = vmatprep.subr.mxu0 0.0
    %758 = vmatpush1.msra.mxu0 0.0
    %759 = vmatprep.subr.mxu0 0.0
    %760 = vmatpush1.msra.mxu0 0.0
    %761 = vmatprep.subr.mxu0 0.0
    %762 = vmatpush1.msra.mxu0 0.0
    %763 = vmatprep.subr.mxu0 0.0
    %764 = vmatpush1.msra.mxu0 0.0
    %765 = vmatprep.subr.mxu0 0.0
    %766 = vmatpush1.msra.mxu0 0.0
    %767 = vmatprep.subr.mxu0 0.0
    %768 = vmatpush1.msra.mxu0 0.0
    %769 = vmatprep.subr.mxu0 0.0
    %770 = vmatpush1.msra.mxu0 0.0
    %771 = vmatprep.subr.mxu0 0.0
    %772 = vmatpush1.msra.mxu0 0.0
    %773 = vmatprep.subr.mxu0 0.0
    %774 = vmatpush1.msra.mxu0 0.0
    %775 = vmatprep.subr.mxu0 0.0
    %776 = vmatpush1.msra.mxu0 0.0
    %777 = vmatprep.subr.mxu0 0.0
    %778 = vmatpush1.msra.mxu0 0.0
    %779 = vmatprep.subr.mxu0 0.0
    %780 = vmatpush1.msra.mxu0 %v755
    %781 = vmatprep.subr.mxu0 0.0
    %782 = vmatpush1.msra.mxu0 %v703
    %783 = vmatprep.subr.mxu0 0.0
    %784 = vmatpush1.msra.mxu0 %v702
    %785 = vmatprep.subr.mxu0 0.0
    %786 = vmatpush1.msra.mxu0 %v701
    %787 = vmatprep.subr.mxu0 0.0
    %788 = vmatpush1.msra.mxu0 %v700
    %789 = vmatprep.subr.mxu0 0.0
    %790 = vmatpush2.msra.mxu0 0.0
    %791 = vmatprep.subr.mxu0 0.0
    %792 = vmatpush2.msra.mxu0 0.0
    %793 = vmatprep.subr.mxu0 0.0
    %794 = vmatpush2.msra.mxu0 0.0
    %795 = vmatprep.subr.mxu0 0.0
    %796 = vmatpush2.msra.mxu0 0.0
    %797 = vmatprep.subr.mxu0 0.0
    %798 = vmatpush2.msra.mxu0 0.0
    %799 = vmatprep.subr.mxu0 0.0
    %800 = vmatpush2.msra.mxu0 0.0
    %801 = vmatprep.subr.mxu0 0.0
    %802 = vmatpush2.msra.mxu0 0.0
    %803 = vmatprep.subr.mxu0 0.0
    %804 = vmatpush2.msra.mxu0 0.0
    %805 = vmatprep.subr.mxu0 0.0
    %806 = vmatpush2.msra.mxu0 0.0
    %807 = vmatprep.subr.mxu0 0.0
    %808 = vmatpush2.msra.mxu0 0.0
    %809 = vmatprep.subr.mxu0 0.0
    %810 = vmatpush2.msra.mxu0 0.0
    %811 = vmatprep.subr.mxu0 0.0
    %812 = vmatpush2.msra.mxu0 0.0
    %813 = vmatprep.subr.mxu0 0.0
    %814 = vmatpush2.msra.mxu0 0.0
    %815 = vmatprep.subr.mxu0 0.0
    %816 = vmatpush2.msra.mxu0 0.0
    %817 = vmatprep.subr.mxu0 0.0
    %818 = vmatpush2.msra.mxu0 0.0
    %819 = vmatprep.subr.mxu0 0.0
    %820 = vmatpush2.msra.mxu0 0.0
    %821 = vmatprep.mubr.f32.mxu0 0.0
    %822 = vmatmul.mubr.f32.gmra.mxu0 %v706
    %v823 = vpop.f32.mrf.mxu0
    %v824 = vadd.f32 0.0, %v823
    %v825 = vpop.f32.mrf.mxu0
    %826 = vmatprep.mubr.f32.mxu0 0.0
    %827 = vmatmul.mubr.f32.gmra.mxu0 %v709
    %v828 = vpop.f32.mrf.mxu0
    %v829 = vadd.f32 0.0, %v828
    %v830 = vpop.f32.mrf.mxu0
    %831 = vmatprep.mubr.f32.mxu0 0.0
    %832 = vmatmul.mubr.f32.gmra.mxu0 %v712
    %v833 = vpop.f32.mrf.mxu0
    %v834 = vadd.f32 0.0, %v833
    %v835 = vpop.f32.mrf.mxu0
    %836 = vmatprep.mubr.f32.mxu0 0.0
    %837 = vmatmul.mubr.f32.gmra.mxu0 %v715
    %v838 = vpop.f32.mrf.mxu0
    %v839 = vadd.f32 0.0, %v838
    %v840 = vpop.f32.mrf.mxu0
    %841 = vmatprep.mubr.f32.mxu0 0.0
    %842 = vmatmul.mubr.f32.gmra.mxu0 %v718
    %v843 = vpop.f32.mrf.mxu0
    %v844 = vadd.f32 0.0, %v843
    %v845 = vpop.f32.mrf.mxu0
    %846 = vmatprep.mubr.f32.mxu0 0.0
    %847 = vmatmul.mubr.f32.gmra.mxu0 %v721
    %v848 = vpop.f32.mrf.mxu0
    %v849 = vadd.f32 0.0, %v848
    %v850 = vpop.f32.mrf.mxu0
    %851 = vmatprep.mubr.f32.mxu0 0.0
    %852 = vmatmul.mubr.f32.gmra.mxu0 %v724
    %v853 = vpop.f32.mrf.mxu0
    %v854 = vadd.f32 0.0, %v853
    %v855 = vpop.f32.mrf.mxu0
    %856 = vmatprep.mubr.f32.mxu0 0.0
    %857 = vmatmul.mubr.f32.gmra.mxu0 %v727
    %v858 = vpop.f32.mrf.mxu0
    %v859 = vadd.f32 0.0, %v858
    %v860 = vpop.f32.mrf.mxu0
    %861 = vmatprep.mubr.f32.mxu0 0.0
    %862 = vmatmul.mubr.f32.gmra.mxu0 %v730
    %v863 = vpop.f32.mrf.mxu0
    %v864 = vadd.f32 0.0, %v863
    %v865 = vpop.f32.mrf.mxu0
    %866 = vmatprep.mubr.f32.mxu0 0.0
    %867 = vmatmul.mubr.f32.gmra.mxu0 %v733
    %v868 = vpop.f32.mrf.mxu0
    %v869 = vadd.f32 0.0, %v868
    %v870 = vpop.f32.mrf.mxu0
    %871 = vmatprep.mubr.f32.mxu0 0.0
    %872 = vmatmul.mubr.f32.gmra.mxu0 %v736
    %v873 = vpop.f32.mrf.mxu0
    %v874 = vadd.f32 0.0, %v873
    %v875 = vpop.f32.mrf.mxu0
    %876 = vmatprep.mubr.f32.mxu0 0.0
    %877 = vmatmul.mubr.f32.gmra.mxu0 %v739
    %v878 = vpop.f32.mrf.mxu0
    %v879 = vadd.f32 0.0, %v878
    %v880 = vpop.f32.mrf.mxu0
    %881 = vmatprep.mubr.f32.mxu0 0.0
    %882 = vmatmul.mubr.f32.gmra.mxu0 %v742
    %v883 = vpop.f32.mrf.mxu0
    %v884 = vadd.f32 0.0, %v883
    %v885 = vpop.f32.mrf.mxu0
    %886 = vmatprep.mubr.f32.mxu0 0.0
    %887 = vmatmul.mubr.f32.gmra.mxu0 %v745
    %v888 = vpop.f32.mrf.mxu0
    %v889 = vadd.f32 0.0, %v888
    %v890 = vpop.f32.mrf.mxu0
    %891 = vmatprep.mubr.f32.mxu0 0.0
    %892 = vmatmul.mubr.f32.gmra.mxu0 %v748
    %v893 = vpop.f32.mrf.mxu0
    %v894 = vadd.f32 0.0, %v893
    %v895 = vpop.f32.mrf.mxu0
    %896 = vmatprep.mubr.f32.mxu0 0.0
    %897 = vmatmul.mubr.f32.gmra.mxu0 %v751
    %v898 = vpop.f32.mrf.mxu0
    %v899 = vadd.f32 0.0, %v898
    %v900 = vpop.f32.mrf.mxu0
    %901 = vdwg.mxu0
    %vm902 = vcmask 130048
    %v903 = vsel %vm902, %v824, 0.0
    %v904 = vsel %vm902, %v829, 0.0
    %v905 = vadd.f32 %v903, %v904
    %v906 = vsel %vm902, %v834, 0.0
    %v907 = vadd.f32 %v905, %v906
    %v908 = vsel %vm902, %v839, 0.0
    %v909 = vadd.f32 %v907, %v908
    %v910 = vsel %vm902, %v844, 0.0
    %v911 = vadd.f32 %v909, %v910
    %v912 = vsel %vm902, %v849, 0.0
    %v913 = vadd.f32 %v911, %v912
    %v914 = vsel %vm902, %v854, 0.0
    %v915 = vadd.f32 %v913, %v914
    %v916 = vsel %vm902, %v859, 0.0
    %v917 = vadd.f32 %v915, %v916
    %v918 = vsel %vm902, %v864, 0.0
    %v919 = vadd.f32 %v917, %v918
    %v920 = vsel %vm902, %v869, 0.0
    %v921 = vadd.f32 %v919, %v920
    %v922 = vsel %vm902, %v874, 0.0
    %v923 = vadd.f32 %v921, %v922
    %v924 = vsel %vm902, %v879, 0.0
    %v925 = vadd.f32 %v923, %v924
    %v926 = vsel %vm902, %v884, 0.0
    %v927 = vadd.f32 %v925, %v926
    %v928 = vsel %vm902, %v889, 0.0
    %v929 = vadd.f32 %v927, %v928
    %v930 = vsel %vm902, %v894, 0.0
    %v931 = vadd.f32 %v929, %v930
    %v932 = vsel %vm902, %v899, 0.0
    %v933 = vadd.f32 %v931, %v932
    %v934 = vrot.slane %v933, 4
    %v935 = vadd.f32 %v933, %v934
    %v936 = vrot.slane %v935, 2
    %v937 = vadd.f32 %v935, %v936
    %v938 = vrot.slane %v937, 1
    %v939 = vadd.f32 %v937, %v938
    %v940 = vrcp.pop 128.0
    %v941 = vmul.f32 %v939, %v940
    %v942 = vsub.f32 %v824, %v941
    %v943 = vsub.f32 %v829, %v941
    %v944 = vsub.f32 %v834, %v941
    %v945 = vsub.f32 %v839, %v941
    %v946 = vsub.f32 %v844, %v941
    %v947 = vsub.f32 %v849, %v941
    %v948 = vsub.f32 %v854, %v941
    %v949 = vsub.f32 %v859, %v941
    %v950 = vsub.f32 %v864, %v941
    %v951 = vsub.f32 %v869, %v941
    %v952 = vsub.f32 %v874, %v941
    %v953 = vsub.f32 %v879, %v941
    %v954 = vsub.f32 %v884, %v941
    %v955 = vsub.f32 %v889, %v941
    %v956 = vsub.f32 %v894, %v941
    %v957 = vsub.f32 %v899, %v941
    %v958 = vmul.f32 %v942, %v942
    %v959 = vmul.f32 %v943, %v943
    %v960 = vmul.f32 %v944, %v944
    %v961 = vmul.f32 %v945, %v945
    %v962 = vmul.f32 %v946, %v946
    %v963 = vmul.f32 %v947, %v947
    %v964 = vmul.f32 %v948, %v948
    %v965 = vmul.f32 %v949, %v949
    %v966 = vmul.f32 %v950, %v950
    %v967 = vmul.f32 %v951, %v951
    %v968 = vmul.f32 %v952, %v952
    %v969 = vmul.f32 %v953, %v953
    %v970 = vmul.f32 %v954, %v954
    %v971 = vmul.f32 %v955, %v955
    %v972 = vmul.f32 %v956, %v956
    %v973 = vmul.f32 %v957, %v957
    %v974 = vsel %vm902, %v958, 0.0
    %v975 = vsel %vm902, %v959, 0.0
    %v976 = vadd.f32 %v974, %v975
    %v977 = vsel %vm902, %v960, 0.0
    %v978 = vadd.f32 %v976, %v977
    %v979 = vsel %vm902, %v961, 0.0
    %v980 = vadd.f32 %v978, %v979
    %v981 = vsel %vm902, %v962, 0.0
    %v982 = vadd.f32 %v980, %v981
    %v983 = vsel %vm902, %v963, 0.0
    %v984 = vadd.f32 %v982, %v983
    %v985 = vsel %vm902, %v964, 0.0
    %v986 = vadd.f32 %v984, %v985
    %v987 = vsel %vm902, %v965, 0.0
    %v988 = vadd.f32 %v986, %v987
    %v989 = vsel %vm902, %v966, 0.0
    %v990 = vadd.f32 %v988, %v989
    %v991 = vsel %vm902, %v967, 0.0
    %v992 = vadd.f32 %v990, %v991
    %v993 = vsel %vm902, %v968, 0.0
    %v994 = vadd.f32 %v992, %v993
    %v995 = vsel %vm902, %v969, 0.0
    %v996 = vadd.f32 %v994, %v995
    %v997 = vsel %vm902, %v970, 0.0
    %v998 = vadd.f32 %v996, %v997
    %v999 = vsel %vm902, %v971, 0.0
    %v1000 = vadd.f32 %v998, %v999
    %v1001 = vsel %vm902, %v972, 0.0
    %v1002 = vadd.f32 %v1000, %v1001
    %v1003 = vsel %vm902, %v973, 0.0
    %v1004 = vadd.f32 %v1002, %v1003
    %v1005 = vrot.slane %v1004, 4
    %v1006 = vadd.f32 %v1004, %v1005
    %v1007 = vrot.slane %v1006, 2
    %v1008 = vadd.f32 %v1006, %v1007
    %v1009 = vrot.slane %v1008, 1
    %v1010 = vadd.f32 %v1008, %v1009
    %v1011 = vmul.f32 %v1010, %v940
    %v1012 = vadd.f32 %v1011, 1e-05
    %v1013 = vrsqrt.pop %v1012
    %v1014 = vmul.f32 %v942, %v1013
    %v1015 = vmul.f32 %v943, %v1013
    %v1016 = vmul.f32 %v944, %v1013
    %v1017 = vmul.f32 %v945, %v1013
    %v1018 = vmul.f32 %v946, %v1013
    %v1019 = vmul.f32 %v947, %v1013
    %v1020 = vmul.f32 %v948, %v1013
    %v1021 = vmul.f32 %v949, %v1013
    %v1022 = vmul.f32 %v950, %v1013
    %v1023 = vmul.f32 %v951, %v1013
    %v1024 = vmul.f32 %v952, %v1013
    %v1025 = vmul.f32 %v953, %v1013
    %v1026 = vmul.f32 %v954, %v1013
    %v1027 = vmul.f32 %v955, %v1013
    %v1028 = vmul.f32 %v956, %v1013
    %v1029 = vmul.f32 %v957, %v1013
    %v1030 = vld [vmem:[%s2] sm:$0x1]
    %v1032 = vlaneseq
    %v1033 = vshrl.u32 %v1032, 7
    %v1034 = vsub.s32 0, %v1033
    %v1035 = vrot.slane %v1030, %v1034
    %v1037 = vmul.f32 %v1014, %v1035
    %v1038 = vmul.f32 %v1015, %v1035
    %v1039 = vmul.f32 %v1016, %v1035
    %v1040 = vmul.f32 %v1017, %v1035
    %v1041 = vmul.f32 %v1018, %v1035
    %v1042 = vmul.f32 %v1019, %v1035
    %v1043 = vmul.f32 %v1020, %v1035
    %v1044 = vmul.f32 %v1021, %v1035
    %v1045 = vmul.f32 %v1022, %v1035
    %v1046 = vmul.f32 %v1023, %v1035
    %v1047 = vmul.f32 %v1024, %v1035
    %v1048 = vmul.f32 %v1025, %v1035
    %v1049 = vmul.f32 %v1026, %v1035
    %v1050 = vmul.f32 %v1027, %v1035
    %v1051 = vmul.f32 %v1028, %v1035
    %v1052 = vmul.f32 %v1029, %v1035
    %v1053 = vld [vmem:[%s3] sm:$0x1]
    %v1055 = vlaneseq
    %v1056 = vshrl.u32 %v1055, 7
    %v1057 = vsub.s32 0, %v1056
    %v1058 = vrot.slane %v1053, %v1057
    %v1060 = vadd.f32 %v1037, %v1058
    %v1061 = vadd.f32 %v1038, %v1058
    %v1062 = vadd.f32 %v1039, %v1058
    %v1063 = vadd.f32 %v1040, %v1058
    %v1064 = vadd.f32 %v1041, %v1058
    %v1065 = vadd.f32 %v1042, %v1058
    %v1066 = vadd.f32 %v1043, %v1058
    %v1067 = vadd.f32 %v1044, %v1058
    %v1068 = vadd.f32 %v1045, %v1058
    %v1069 = vadd.f32 %v1046, %v1058
    %v1070 = vadd.f32 %v1047, %v1058
    %v1071 = vadd.f32 %v1048, %v1058
    %v1072 = vadd.f32 %v1049, %v1058
    %v1073 = vadd.f32 %v1050, %v1058
    %v1074 = vadd.f32 %v1051, %v1058
    %v1075 = vadd.f32 %v1052, %v1058
    %v1076 = vmax.f32 %v1060, 0.0
    %v1077 = vmax.f32 %v1061, 0.0
    %v1078 = vmax.f32 %v1062, 0.0
    %v1079 = vmax.f32 %v1063, 0.0
    %v1080 = vmax.f32 %v1064, 0.0
    %v1081 = vmax.f32 %v1065, 0.0
    %v1082 = vmax.f32 %v1066, 0.0
    %v1083 = vmax.f32 %v1067, 0.0
    %v1084 = vmax.f32 %v1068, 0.0
    %v1085 = vmax.f32 %v1069, 0.0
    %v1086 = vmax.f32 %v1070, 0.0
    %v1087 = vmax.f32 %v1071, 0.0
    %v1088 = vmax.f32 %v1072, 0.0
    %v1089 = vmax.f32 %v1073, 0.0
    %v1090 = vmax.f32 %v1074, 0.0
    %v1091 = vmax.f32 %v1075, 0.0
    %1092 = vst [vmem:[#allocation3] sm:$0xff] 0.0
    %1093 = vst.msk [vmem:[#allocation3 + $0x8] sm:$0xff] %vm902, 0.0
    %1094 = vst [vmem:[#allocation3 + $0x10] sm:$0xff] 0.0
    %1095 = vst.msk [vmem:[#allocation3 + $0x18] sm:$0xff] %vm902, 0.0
    %1096 = vst [vmem:[#allocation3 + $0x20] sm:$0xff] 0.0
    %1097 = vst.msk [vmem:[#allocation3 + $0x28] sm:$0xff] %vm902, 0.0
    %1098 = vst [vmem:[#allocation3 + $0x30] sm:$0xff] 0.0
    %1099 = vst.msk [vmem:[#allocation3 + $0x38] sm:$0xff] %vm902, 0.0
    %1100 = vst [vmem:[#allocation3 + $0x40] sm:$0xff] 0.0
    %1101 = vst.msk [vmem:[#allocation3 + $0x48] sm:$0xff] %vm902, 0.0
    %1102 = vst [vmem:[#allocation3 + $0x50] sm:$0xff] 0.0
    %1103 = vst.msk [vmem:[#allocation3 + $0x58] sm:$0xff] %vm902, 0.0
    %1104 = vst [vmem:[#allocation3 + $0x60] sm:$0xff] 0.0
    %1105 = vst.msk [vmem:[#allocation3 + $0x68] sm:$0xff] %vm902, 0.0
    %1106 = vst [vmem:[#allocation3 + $0x70] sm:$0xff] 0.0
    %1107 = vst.msk [vmem:[#allocation3 + $0x78] sm:$0xff] %vm902, 0.0
    %1108 = vst [vmem:[#allocation3 + $0x80] sm:$0xff] 0.0
    %1109 = vst.msk [vmem:[#allocation3 + $0x88] sm:$0xff] %vm902, 0.0
    %1110 = vst [vmem:[#allocation3 + $0x90] sm:$0xff] 0.0
    %1111 = vst.msk [vmem:[#allocation3 + $0x98] sm:$0xff] %vm902, 0.0
    %1112 = vst [vmem:[#allocation3 + $0xa0] sm:$0xff] 0.0
    %1113 = vst.msk [vmem:[#allocation3 + $0xa8] sm:$0xff] %vm902, 0.0
    %1114 = vst [vmem:[#allocation3 + $0xb0] sm:$0xff] 0.0
    %1115 = vst.msk [vmem:[#allocation3 + $0xb8] sm:$0xff] %vm902, 0.0
    %1116 = vst [vmem:[#allocation3 + $0xc0] sm:$0xff] 0.0
    %1117 = vst.msk [vmem:[#allocation3 + $0xc8] sm:$0xff] %vm902, 0.0
    %1118 = vst [vmem:[#allocation3 + $0xd0] sm:$0xff] 0.0
    %1119 = vst.msk [vmem:[#allocation3 + $0xd8] sm:$0xff] %vm902, 0.0
    %1120 = vst [vmem:[#allocation3 + $0xe0] sm:$0xff] 0.0
    %1121 = vst.msk [vmem:[#allocation3 + $0xe8] sm:$0xff] %vm902, 0.0
    %1122 = vst [vmem:[#allocation3 + $0xf0] sm:$0xff] 0.0
    %1123 = vst.msk [vmem:[#allocation3 + $0xf8] sm:$0xff] %vm902, 0.0
    %v1138 = vrot.slane %v1076, 7
    %v1139 = vrot.slane %v1077, 7
    %v1140 = vrot.slane %v1078, 7
    %v1141 = vrot.slane %v1079, 7
    %v1142 = vrot.slane %v1080, 7
    %v1143 = vrot.slane %v1081, 7
    %v1144 = vrot.slane %v1082, 7
    %v1145 = vrot.slane %v1084, 7
    %v1146 = vrot.slane %v1085, 7
    %v1147 = vrot.slane %v1086, 7
    %v1148 = vrot.slane %v1087, 7
    %v1149 = vrot.slane %v1088, 7
    %v1150 = vrot.slane %v1089, 7
    %v1151 = vrot.slane %v1090, 7
    %s1166 = scalar_lea.vmem [#allocation3], 16
    %vm1167 = vcmask 130049
    %1168 = vst.msk [vmem:[%s1166] sm:$0xfe] %vm1167, %v1138
    %1169 = vst.msk [vmem:[%s1166 + $0x10] sm:$0xfe] %vm1167, %v1139
    %1170 = vst.msk [vmem:[%s1166 + $0x20] sm:$0xfe] %vm1167, %v1140
    %1171 = vst.msk [vmem:[%s1166 + $0x30] sm:$0xfe] %vm1167, %v1141
    %1172 = vst.msk [vmem:[%s1166 + $0x40] sm:$0xfe] %vm1167, %v1142
    %1173 = vst.msk [vmem:[%s1166 + $0x50] sm:$0xfe] %vm1167, %v1143
    %1174 = vst.msk [vmem:[%s1166 + $0x60] sm:$0xfe] %vm1167, %v1144
    %1175 = vst.msk [vmem:[%s1166 + $0x80] sm:$0xfe] %vm1167, %v1145
    %1176 = vst.msk [vmem:[%s1166 + $0x90] sm:$0xfe] %vm1167, %v1146
    %1177 = vst.msk [vmem:[%s1166 + $0xa0] sm:$0xfe] %vm1167, %v1147
    %1178 = vst.msk [vmem:[%s1166 + $0xb0] sm:$0xfe] %vm1167, %v1148
    %1179 = vst.msk [vmem:[%s1166 + $0xc0] sm:$0xfe] %vm1167, %v1149
    %1180 = vst.msk [vmem:[%s1166 + $0xd0] sm:$0xfe] %vm1167, %v1150
    %1181 = vst.msk [vmem:[%s1166 + $0xe0] sm:$0xfe] %vm1167, %v1151
    %1182 = vrot.lane.b32.xlu0 %v1076, 16
    %v1183 = vpop.permute.xlu0 %1182
    %1184 = vrot.lane.b32.xlu0 %v1077, 16
    %v1185 = vpop.permute.xlu0 %1184
    %1186 = vrot.lane.b32.xlu0 %v1078, 16
    %v1187 = vpop.permute.xlu0 %1186
    %1188 = vrot.lane.b32.xlu0 %v1079, 16
    %v1189 = vpop.permute.xlu0 %1188
    %1190 = vrot.lane.b32.xlu0 %v1080, 16
    %v1191 = vpop.permute.xlu0 %1190
    %1192 = vrot.lane.b32.xlu0 %v1081, 16
    %v1193 = vpop.permute.xlu0 %1192
    %1194 = vrot.lane.b32.xlu0 %v1082, 16
    %v1195 = vpop.permute.xlu0 %1194
    %1196 = vrot.lane.b32.xlu0 %v1084, 16
    %v1197 = vpop.permute.xlu0 %1196
    %1198 = vrot.lane.b32.xlu0 %v1085, 16
    %v1199 = vpop.permute.xlu0 %1198
    %1200 = vrot.lane.b32.xlu0 %v1086, 16
    %v1201 = vpop.permute.xlu0 %1200
    %1202 = vrot.lane.b32.xlu0 %v1087, 16
    %v1203 = vpop.permute.xlu0 %1202
    %1204 = vrot.lane.b32.xlu0 %v1088, 16
    %v1205 = vpop.permute.xlu0 %1204
    %1206 = vrot.lane.b32.xlu0 %v1089, 16
    %v1207 = vpop.permute.xlu0 %1206
    %1208 = vrot.lane.b32.xlu0 %v1090, 16
    %v1209 = vpop.permute.xlu0 %1208
    %vm1224 = vcmask 261248
    %1225 = vst.msk [vmem:[%s1166] sm:$0xff] %vm1224, %v1183
    %1226 = vst.msk [vmem:[%s1166 + $0x10] sm:$0xff] %vm1224, %v1185
    %1227 = vst.msk [vmem:[%s1166 + $0x20] sm:$0xff] %vm1224, %v1187
    %1228 = vst.msk [vmem:[%s1166 + $0x30] sm:$0xff] %vm1224, %v1189
    %1229 = vst.msk [vmem:[%s1166 + $0x40] sm:$0xff] %vm1224, %v1191
    %1230 = vst.msk [vmem:[%s1166 + $0x50] sm:$0xff] %vm1224, %v1193
    %1231 = vst.msk [vmem:[%s1166 + $0x60] sm:$0xff] %vm1224, %v1195
    %1232 = vst.msk [vmem:[%s1166 + $0x80] sm:$0xff] %vm1224, %v1197
    %1233 = vst.msk [vmem:[%s1166 + $0x90] sm:$0xff] %vm1224, %v1199
    %1234 = vst.msk [vmem:[%s1166 + $0xa0] sm:$0xff] %vm1224, %v1201
    %1235 = vst.msk [vmem:[%s1166 + $0xb0] sm:$0xff] %vm1224, %v1203
    %1236 = vst.msk [vmem:[%s1166 + $0xc0] sm:$0xff] %vm1224, %v1205
    %1237 = vst.msk [vmem:[%s1166 + $0xd0] sm:$0xff] %vm1224, %v1207
    %1238 = vst.msk [vmem:[%s1166 + $0xe0] sm:$0xff] %vm1224, %v1209
    %v1239 = vrot.slane %v1076, 1
    %v1240 = vrot.slane %v1077, 1
    %v1241 = vrot.slane %v1078, 1
    %v1242 = vrot.slane %v1079, 1
    %v1243 = vrot.slane %v1080, 1
    %v1244 = vrot.slane %v1081, 1
    %v1245 = vrot.slane %v1082, 1
    %v1246 = vrot.slane %v1084, 1
    %v1247 = vrot.slane %v1085, 1
    %v1248 = vrot.slane %v1086, 1
    %v1249 = vrot.slane %v1087, 1
    %v1250 = vrot.slane %v1088, 1
    %v1251 = vrot.slane %v1089, 1
    %v1252 = vrot.slane %v1090, 1
    %1253 = vrot.lane.b32.xlu0 %v1239, 32
    %v1254 = vpop.permute.xlu0 %1253
    %1255 = vrot.lane.b32.xlu0 %v1240, 32
    %v1256 = vpop.permute.xlu0 %1255
    %1257 = vrot.lane.b32.xlu0 %v1241, 32
    %v1258 = vpop.permute.xlu0 %1257
    %1259 = vrot.lane.b32.xlu0 %v1242, 32
    %v1260 = vpop.permute.xlu0 %1259
    %1261 = vrot.lane.b32.xlu0 %v1243, 32
    %v1262 = vpop.permute.xlu0 %1261
    %1263 = vrot.lane.b32.xlu0 %v1244, 32
    %v1264 = vpop.permute.xlu0 %1263
    %1265 = vrot.lane.b32.xlu0 %v1245, 32
    %v1266 = vpop.permute.xlu0 %1265
    %1267 = vrot.lane.b32.xlu0 %v1246, 32
    %v1268 = vpop.permute.xlu0 %1267
    %1269 = vrot.lane.b32.xlu0 %v1247, 32
    %v1270 = vpop.permute.xlu0 %1269
    %1271 = vrot.lane.b32.xlu0 %v1248, 32
    %v1272 = vpop.permute.xlu0 %1271
    %1273 = vrot.lane.b32.xlu0 %v1249, 32
    %v1274 = vpop.permute.xlu0 %1273
    %1275 = vrot.lane.b32.xlu0 %v1250, 32
    %v1276 = vpop.permute.xlu0 %1275
    %1277 = vrot.lane.b32.xlu0 %v1251, 32
    %v1278 = vpop.permute.xlu0 %1277
    %1279 = vrot.lane.b32.xlu0 %v1252, 32
    %v1280 = vpop.permute.xlu0 %1279
    %vm1295 = vcmask 391424
    %1296 = vst.msk [vmem:[%s1166] sm:$0x7f] %vm1295, %v1254
    %1297 = vst.msk [vmem:[%s1166 + $0x10] sm:$0x7f] %vm1295, %v1256
    %1298 = vst.msk [vmem:[%s1166 + $0x20] sm:$0x7f] %vm1295, %v1258
    %1299 = vst.msk [vmem:[%s1166 + $0x30] sm:$0x7f] %vm1295, %v1260
    %1300 = vst.msk [vmem:[%s1166 + $0x40] sm:$0x7f] %vm1295, %v1262
    %1301 = vst.msk [vmem:[%s1166 + $0x50] sm:$0x7f] %vm1295, %v1264
    %1302 = vst.msk [vmem:[%s1166 + $0x60] sm:$0x7f] %vm1295, %v1266
    %1303 = vst.msk [vmem:[%s1166 + $0x80] sm:$0x7f] %vm1295, %v1268
    %1304 = vst.msk [vmem:[%s1166 + $0x90] sm:$0x7f] %vm1295, %v1270
    %1305 = vst.msk [vmem:[%s1166 + $0xa0] sm:$0x7f] %vm1295, %v1272
    %1306 = vst.msk [vmem:[%s1166 + $0xb0] sm:$0x7f] %vm1295, %v1274
    %1307 = vst.msk [vmem:[%s1166 + $0xc0] sm:$0x7f] %vm1295, %v1276
    %1308 = vst.msk [vmem:[%s1166 + $0xd0] sm:$0x7f] %vm1295, %v1278
    %1309 = vst.msk [vmem:[%s1166 + $0xe0] sm:$0x7f] %vm1295, %v1280
    %v1312 = vrot.slane %v1083, 7
    %v1313 = vrot.slane %v1091, 7
    %1314 = vrot.lane.b32.xlu0 %v1138, 48
    %v1315 = vpop.permute.xlu0 %1314
    %1316 = vrot.lane.b32.xlu0 %v1139, 48
    %v1317 = vpop.permute.xlu0 %1316
    %1318 = vrot.lane.b32.xlu0 %v1140, 48
    %v1319 = vpop.permute.xlu0 %1318
    %1320 = vrot.lane.b32.xlu0 %v1141, 48
    %v1321 = vpop.permute.xlu0 %1320
    %1322 = vrot.lane.b32.xlu0 %v1142, 48
    %v1323 = vpop.permute.xlu0 %1322
    %1324 = vrot.lane.b32.xlu0 %v1143, 48
    %v1325 = vpop.permute.xlu0 %1324
    %1326 = vrot.lane.b32.xlu0 %v1144, 48
    %v1327 = vpop.permute.xlu0 %1326
    %1328 = vrot.lane.b32.xlu0 %v1312, 48
    %v1329 = vpop.permute.xlu0 %1328
    %1330 = vrot.lane.b32.xlu0 %v1145, 48
    %v1331 = vpop.permute.xlu0 %1330
    %1332 = vrot.lane.b32.xlu0 %v1146, 48
    %v1333 = vpop.permute.xlu0 %1332
    %1334 = vrot.lane.b32.xlu0 %v1147, 48
    %v1335 = vpop.permute.xlu0 %1334
    %1336 = vrot.lane.b32.xlu0 %v1148, 48
    %v1337 = vpop.permute.xlu0 %1336
    %1338 = vrot.lane.b32.xlu0 %v1149, 48
    %v1339 = vpop.permute.xlu0 %1338
    %1340 = vrot.lane.b32.xlu0 %v1150, 48
    %v1341 = vpop.permute.xlu0 %1340
    %1342 = vrot.lane.b32.xlu0 %v1151, 48
    %v1343 = vpop.permute.xlu0 %1342
    %1344 = vrot.lane.b32.xlu0 %v1313, 48
    %v1345 = vpop.permute.xlu0 %1344
    %vm1362 = vcmask 523649
    %1363 = vst.msk [vmem:[#allocation3] sm:$0xfe] %vm1362, %v1315
    %1364 = vst.msk [vmem:[#allocation3 + $0x10] sm:$0xfe] %vm1362, %v1317
    %1365 = vst.msk [vmem:[#allocation3 + $0x20] sm:$0xfe] %vm1362, %v1319
    %1366 = vst.msk [vmem:[#allocation3 + $0x30] sm:$0xfe] %vm1362, %v1321
    %1367 = vst.msk [vmem:[#allocation3 + $0x40] sm:$0xfe] %vm1362, %v1323
    %1368 = vst.msk [vmem:[#allocation3 + $0x50] sm:$0xfe] %vm1362, %v1325
    %1369 = vst.msk [vmem:[#allocation3 + $0x60] sm:$0xfe] %vm1362, %v1327
    %1370 = vst.msk [vmem:[#allocation3 + $0x70] sm:$0xfe] %vm1362, %v1329
    %1371 = vst.msk [vmem:[#allocation3 + $0x80] sm:$0xfe] %vm1362, %v1331
    %1372 = vst.msk [vmem:[#allocation3 + $0x90] sm:$0xfe] %vm1362, %v1333
    %1373 = vst.msk [vmem:[#allocation3 + $0xa0] sm:$0xfe] %vm1362, %v1335
    %1374 = vst.msk [vmem:[#allocation3 + $0xb0] sm:$0xfe] %vm1362, %v1337
    %1375 = vst.msk [vmem:[#allocation3 + $0xc0] sm:$0xfe] %vm1362, %v1339
    %1376 = vst.msk [vmem:[#allocation3 + $0xd0] sm:$0xfe] %vm1362, %v1341
    %1377 = vst.msk [vmem:[#allocation3 + $0xe0] sm:$0xfe] %vm1362, %v1343
    %1378 = vst.msk [vmem:[#allocation3 + $0xf0] sm:$0xfe] %vm1362, %v1345
    %1379 = vrot.lane.b32.xlu0 %v1076, 64
    %v1380 = vpop.permute.xlu0 %1379
    %1381 = vrot.lane.b32.xlu0 %v1077, 64
    %v1382 = vpop.permute.xlu0 %1381
    %1383 = vrot.lane.b32.xlu0 %v1078, 64
    %v1384 = vpop.permute.xlu0 %1383
    %1385 = vrot.lane.b32.xlu0 %v1079, 64
    %v1386 = vpop.permute.xlu0 %1385
    %1387 = vrot.lane.b32.xlu0 %v1080, 64
    %v1388 = vpop.permute.xlu0 %1387
    %1389 = vrot.lane.b32.xlu0 %v1081, 64
    %v1390 = vpop.permute.xlu0 %1389
    %1391 = vrot.lane.b32.xlu0 %v1082, 64
    %v1392 = vpop.permute.xlu0 %1391
    %1393 = vrot.lane.b32.xlu0 %v1083, 64
    %v1394 = vpop.permute.xlu0 %1393
    %1395 = vrot.lane.b32.xlu0 %v1084, 64
    %v1396 = vpop.permute.xlu0 %1395
    %1397 = vrot.lane.b32.xlu0 %v1085, 64
    %v1398 = vpop.permute.xlu0 %1397
    %1399 = vrot.lane.b32.xlu0 %v1086, 64
    %v1400 = vpop.permute.xlu0 %1399
    %1401 = vrot.lane.b32.xlu0 %v1087, 64
    %v1402 = vpop.permute.xlu0 %1401
    %1403 = vrot.lane.b32.xlu0 %v1088, 64
    %v1404 = vpop.permute.xlu0 %1403
    %1405 = vrot.lane.b32.xlu0 %v1089, 64
    %v1406 = vpop.permute.xlu0 %1405
    %1407 = vrot.lane.b32.xlu0 %v1090, 64
    %v1408 = vpop.permute.xlu0 %1407
    %1409 = vrot.lane.b32.xlu0 %v1091, 64
    %v1410 = vpop.permute.xlu0 %1409
    %vm1427 = vcmask 654848
    %1428 = vst.msk [vmem:[#allocation3] sm:$0xff] %vm1427, %v1380
    %1429 = vst.msk [vmem:[#allocation3 + $0x10] sm:$0xff] %vm1427, %v1382
    %1430 = vst.msk [vmem:[#allocation3 + $0x20] sm:$0xff] %vm1427, %v1384
    %1431 = vst.msk [vmem:[#allocation3 + $0x30] sm:$0xff] %vm1427, %v1386
    %1432 = vst.msk [vmem:[#allocation3 + $0x40] sm:$0xff] %vm1427, %v1388
    %1433 = vst.msk [vmem:[#allocation3 + $0x50] sm:$0xff] %vm1427, %v1390
    %1434 = vst.msk [vmem:[#allocation3 + $0x60] sm:$0xff] %vm1427, %v1392
    %1435 = vst.msk [vmem:[#allocation3 + $0x70] sm:$0xff] %vm1427, %v1394
    %1436 = vst.msk [vmem:[#allocation3 + $0x80] sm:$0xff] %vm1427, %v1396
    %1437 = vst.msk [vmem:[#allocation3 + $0x90] sm:$0xff] %vm1427, %v1398
    %1438 = vst.msk [vmem:[#allocation3 + $0xa0] sm:$0xff] %vm1427, %v1400
    %1439 = vst.msk [vmem:[#allocation3 + $0xb0] sm:$0xff] %vm1427, %v1402
    %1440 = vst.msk [vmem:[#allocation3 + $0xc0] sm:$0xff] %vm1427, %v1404
    %1441 = vst.msk [vmem:[#allocation3 + $0xd0] sm:$0xff] %vm1427, %v1406
    %1442 = vst.msk [vmem:[#allocation3 + $0xe0] sm:$0xff] %vm1427, %v1408
    %1443 = vst.msk [vmem:[#allocation3 + $0xf0] sm:$0xff] %vm1427, %v1410
    %v1444 = vrot.slane %v1083, 1
    %v1445 = vrot.slane %v1091, 1
    %1446 = vrot.lane.b32.xlu0 %v1239, 80
    %v1447 = vpop.permute.xlu0 %1446
    %1448 = vrot.lane.b32.xlu0 %v1240, 80
    %v1449 = vpop.permute.xlu0 %1448
    %1450 = vrot.lane.b32.xlu0 %v1241, 80
    %v1451 = vpop.permute.xlu0 %1450
    %1452 = vrot.lane.b32.xlu0 %v1242, 80
    %v1453 = vpop.permute.xlu0 %1452
    %1454 = vrot.lane.b32.xlu0 %v1243, 80
    %v1455 = vpop.permute.xlu0 %1454
    %1456 = vrot.lane.b32.xlu0 %v1244, 80
    %v1457 = vpop.permute.xlu0 %1456
    %1458 = vrot.lane.b32.xlu0 %v1245, 80
    %v1459 = vpop.permute.xlu0 %1458
    %1460 = vrot.lane.b32.xlu0 %v1444, 80
    %v1461 = vpop.permute.xlu0 %1460
    %1462 = vrot.lane.b32.xlu0 %v1246, 80
    %v1463 = vpop.permute.xlu0 %1462
    %1464 = vrot.lane.b32.xlu0 %v1247, 80
    %v1465 = vpop.permute.xlu0 %1464
    %1466 = vrot.lane.b32.xlu0 %v1248, 80
    %v1467 = vpop.permute.xlu0 %1466
    %1468 = vrot.lane.b32.xlu0 %v1249, 80
    %v1469 = vpop.permute.xlu0 %1468
    %1470 = vrot.lane.b32.xlu0 %v1250, 80
    %v1471 = vpop.permute.xlu0 %1470
    %1472 = vrot.lane.b32.xlu0 %v1251, 80
    %v1473 = vpop.permute.xlu0 %1472
    %1474 = vrot.lane.b32.xlu0 %v1252, 80
    %v1475 = vpop.permute.xlu0 %1474
    %1476 = vrot.lane.b32.xlu0 %v1445, 80
    %v1477 = vpop.permute.xlu0 %1476
    %vm1494 = vcmask 785024
    %1495 = vst.msk [vmem:[#allocation3] sm:$0x7f] %vm1494, %v1447
    %1496 = vst.msk [vmem:[#allocation3 + $0x10] sm:$0x7f] %vm1494, %v1449
    %1497 = vst.msk [vmem:[#allocation3 + $0x20] sm:$0x7f] %vm1494, %v1451
    %1498 = vst.msk [vmem:[#allocation3 + $0x30] sm:$0x7f] %vm1494, %v1453
    %1499 = vst.msk [vmem:[#allocation3 + $0x40] sm:$0x7f] %vm1494, %v1455
    %1500 = vst.msk [vmem:[#allocation3 + $0x50] sm:$0x7f] %vm1494, %v1457
    %1501 = vst.msk [vmem:[#allocation3 + $0x60] sm:$0x7f] %vm1494, %v1459
    %1502 = vst.msk [vmem:[#allocation3 + $0x70] sm:$0x7f] %vm1494, %v1461
    %1503 = vst.msk [vmem:[#allocation3 + $0x80] sm:$0x7f] %vm1494, %v1463
    %1504 = vst.msk [vmem:[#allocation3 + $0x90] sm:$0x7f] %vm1494, %v1465
    %1505 = vst.msk [vmem:[#allocation3 + $0xa0] sm:$0x7f] %vm1494, %v1467
    %1506 = vst.msk [vmem:[#allocation3 + $0xb0] sm:$0x7f] %vm1494, %v1469
    %1507 = vst.msk [vmem:[#allocation3 + $0xc0] sm:$0x7f] %vm1494, %v1471
    %1508 = vst.msk [vmem:[#allocation3 + $0xd0] sm:$0x7f] %vm1494, %v1473
    %1509 = vst.msk [vmem:[#allocation3 + $0xe0] sm:$0x7f] %vm1494, %v1475
    %1510 = vst.msk [vmem:[#allocation3 + $0xf0] sm:$0x7f] %vm1494, %v1477
    %1511 = vrot.lane.b32.xlu0 %v1139, 96
    %v1512 = vpop.permute.xlu0 %1511
    %1513 = vrot.lane.b32.xlu0 %v1140, 96
    %v1514 = vpop.permute.xlu0 %1513
    %1515 = vrot.lane.b32.xlu0 %v1141, 96
    %v1516 = vpop.permute.xlu0 %1515
    %1517 = vrot.lane.b32.xlu0 %v1142, 96
    %v1518 = vpop.permute.xlu0 %1517
    %1519 = vrot.lane.b32.xlu0 %v1143, 96
    %v1520 = vpop.permute.xlu0 %1519
    %1521 = vrot.lane.b32.xlu0 %v1144, 96
    %v1522 = vpop.permute.xlu0 %1521
    %1523 = vrot.lane.b32.xlu0 %v1312, 96
    %v1524 = vpop.permute.xlu0 %1523
    %1525 = vrot.lane.b32.xlu0 %v1146, 96
    %v1526 = vpop.permute.xlu0 %1525
    %1527 = vrot.lane.b32.xlu0 %v1147, 96
    %v1528 = vpop.permute.xlu0 %1527
    %1529 = vrot.lane.b32.xlu0 %v1148, 96
    %v1530 = vpop.permute.xlu0 %1529
    %1531 = vrot.lane.b32.xlu0 %v1149, 96
    %v1532 = vpop.permute.xlu0 %1531
    %1533 = vrot.lane.b32.xlu0 %v1150, 96
    %v1534 = vpop.permute.xlu0 %1533
    %1535 = vrot.lane.b32.xlu0 %v1151, 96
    %v1536 = vpop.permute.xlu0 %1535
    %1537 = vrot.lane.b32.xlu0 %v1313, 96
    %v1538 = vpop.permute.xlu0 %1537
    %vm1553 = vcmask 917249
    %1554 = vst.msk [vmem:[#allocation3] sm:$0xfe] %vm1553, %v1512
    %1555 = vst.msk [vmem:[#allocation3 + $0x10] sm:$0xfe] %vm1553, %v1514
    %1556 = vst.msk [vmem:[#allocation3 + $0x20] sm:$0xfe] %vm1553, %v1516
    %1557 = vst.msk [vmem:[#allocation3 + $0x30] sm:$0xfe] %vm1553, %v1518
    %1558 = vst.msk [vmem:[#allocation3 + $0x40] sm:$0xfe] %vm1553, %v1520
    %1559 = vst.msk [vmem:[#allocation3 + $0x50] sm:$0xfe] %vm1553, %v1522
    %1560 = vst.msk [vmem:[#allocation3 + $0x60] sm:$0xfe] %vm1553, %v1524
    %1561 = vst.msk [vmem:[#allocation3 + $0x80] sm:$0xfe] %vm1553, %v1526
    %1562 = vst.msk [vmem:[#allocation3 + $0x90] sm:$0xfe] %vm1553, %v1528
    %1563 = vst.msk [vmem:[#allocation3 + $0xa0] sm:$0xfe] %vm1553, %v1530
    %1564 = vst.msk [vmem:[#allocation3 + $0xb0] sm:$0xfe] %vm1553, %v1532
    %1565 = vst.msk [vmem:[#allocation3 + $0xc0] sm:$0xfe] %vm1553, %v1534
    %1566 = vst.msk [vmem:[#allocation3 + $0xd0] sm:$0xfe] %vm1553, %v1536
    %1567 = vst.msk [vmem:[#allocation3 + $0xe0] sm:$0xfe] %vm1553, %v1538
    %1568 = vrot.lane.b32.xlu0 %v1077, 112
    %v1569 = vpop.permute.xlu0 %1568
    %1570 = vrot.lane.b32.xlu0 %v1078, 112
    %v1571 = vpop.permute.xlu0 %1570
    %1572 = vrot.lane.b32.xlu0 %v1079, 112
    %v1573 = vpop.permute.xlu0 %1572
    %1574 = vrot.lane.b32.xlu0 %v1080, 112
    %v1575 = vpop.permute.xlu0 %1574
    %1576 = vrot.lane.b32.xlu0 %v1081, 112
    %v1577 = vpop.permute.xlu0 %1576
    %1578 = vrot.lane.b32.xlu0 %v1082, 112
    %v1579 = vpop.permute.xlu0 %1578
    %1580 = vrot.lane.b32.xlu0 %v1083, 112
    %v1581 = vpop.permute.xlu0 %1580
    %1582 = vrot.lane.b32.xlu0 %v1085, 112
    %v1583 = vpop.permute.xlu0 %1582
    %1584 = vrot.lane.b32.xlu0 %v1086, 112
    %v1585 = vpop.permute.xlu0 %1584
    %1586 = vrot.lane.b32.xlu0 %v1087, 112
    %v1587 = vpop.permute.xlu0 %1586
    %1588 = vrot.lane.b32.xlu0 %v1088, 112
    %v1589 = vpop.permute.xlu0 %1588
    %1590 = vrot.lane.b32.xlu0 %v1089, 112
    %v1591 = vpop.permute.xlu0 %1590
    %1592 = vrot.lane.b32.xlu0 %v1090, 112
    %v1593 = vpop.permute.xlu0 %1592
    %1594 = vrot.lane.b32.xlu0 %v1091, 112
    %v1595 = vpop.permute.xlu0 %1594
    %vm1610 = vcmask 1048448
    %1611 = vst.msk [vmem:[#allocation3] sm:$0xff] %vm1610, %v1569
    %1612 = vst.msk [vmem:[#allocation3 + $0x10] sm:$0xff] %vm1610, %v1571
    %1613 = vst.msk [vmem:[#allocation3 + $0x20] sm:$0xff] %vm1610, %v1573
    %1614 = vst.msk [vmem:[#allocation3 + $0x30] sm:$0xff] %vm1610, %v1575
    %1615 = vst.msk [vmem:[#allocation3 + $0x40] sm:$0xff] %vm1610, %v1577
    %1616 = vst.msk [vmem:[#allocation3 + $0x50] sm:$0xff] %vm1610, %v1579
    %1617 = vst.msk [vmem:[#allocation3 + $0x60] sm:$0xff] %vm1610, %v1581
    %1618 = vst.msk [vmem:[#allocation3 + $0x80] sm:$0xff] %vm1610, %v1583
    %1619 = vst.msk [vmem:[#allocation3 + $0x90] sm:$0xff] %vm1610, %v1585
    %1620 = vst.msk [vmem:[#allocation3 + $0xa0] sm:$0xff] %vm1610, %v1587
    %1621 = vst.msk [vmem:[#allocation3 + $0xb0] sm:$0xff] %vm1610, %v1589
    %1622 = vst.msk [vmem:[#allocation3 + $0xc0] sm:$0xff] %vm1610, %v1591
    %1623 = vst.msk [vmem:[#allocation3 + $0xd0] sm:$0xff] %vm1610, %v1593
    %1624 = vst.msk [vmem:[#allocation3 + $0xe0] sm:$0xff] %vm1610, %v1595
    %vm1639 = vcmask 129024
    %1640 = vst.msk [vmem:[#allocation3 + $0x8] sm:$0x7f] %vm1639, %v1240
    %1641 = vst.msk [vmem:[#allocation3 + $0x18] sm:$0x7f] %vm1639, %v1241
    %1642 = vst.msk [vmem:[#allocation3 + $0x28] sm:$0x7f] %vm1639, %v1242
    %1643 = vst.msk [vmem:[#allocation3 + $0x38] sm:$0x7f] %vm1639, %v1243
    %1644 = vst.msk [vmem:[#allocation3 + $0x48] sm:$0x7f] %vm1639, %v1244
    %1645 = vst.msk [vmem:[#allocation3 + $0x58] sm:$0x7f] %vm1639, %v1245
    %1646 = vst.msk [vmem:[#allocation3 + $0x68] sm:$0x7f] %vm1639, %v1444
    %1647 = vst.msk [vmem:[#allocation3 + $0x88] sm:$0x7f] %vm1639, %v1247
    %1648 = vst.msk [vmem:[#allocation3 + $0x98] sm:$0x7f] %vm1639, %v1248
    %1649 = vst.msk [vmem:[#allocation3 + $0xa8] sm:$0x7f] %vm1639, %v1249
    %1650 = vst.msk [vmem:[#allocation3 + $0xb8] sm:$0x7f] %vm1639, %v1250
    %1651 = vst.msk [vmem:[#allocation3 + $0xc8] sm:$0x7f] %vm1639, %v1251
    %1652 = vst.msk [vmem:[#allocation3 + $0xd8] sm:$0x7f] %vm1639, %v1252
    %1653 = vst.msk [vmem:[#allocation3 + $0xe8] sm:$0x7f] %vm1639, %v1445
    %v1654 = vld [vmem:[#allocation3] sm:$0xff]
    %v1655 = vld [vmem:[#allocation3 + $0x8] sm:$0xff]
    %v1656 = vld [vmem:[#allocation3 + $0x10] sm:$0xff]
    %v1657 = vld [vmem:[#allocation3 + $0x18] sm:$0xff]
    %v1658 = vld [vmem:[#allocation3 + $0x20] sm:$0xff]
    %v1659 = vld [vmem:[#allocation3 + $0x28] sm:$0xff]
    %v1660 = vld [vmem:[#allocation3 + $0x30] sm:$0xff]
    %v1661 = vld [vmem:[#allocation3 + $0x38] sm:$0xff]
    %v1662 = vld [vmem:[#allocation3 + $0x40] sm:$0xff]
    %v1663 = vld [vmem:[#allocation3 + $0x48] sm:$0xff]
    %v1664 = vld [vmem:[#allocation3 + $0x50] sm:$0xff]
    %v1665 = vld [vmem:[#allocation3 + $0x58] sm:$0xff]
    %v1666 = vld [vmem:[#allocation3 + $0x60] sm:$0xff]
    %v1667 = vld [vmem:[#allocation3 + $0x68] sm:$0xff]
    %v1668 = vld [vmem:[#allocation3 + $0x70] sm:$0xff]
    %v1669 = vld [vmem:[#allocation3 + $0x78] sm:$0xff]
    %v1670 = vld [vmem:[#allocation3 + $0x80] sm:$0xff]
    %v1671 = vld [vmem:[#allocation3 + $0x88] sm:$0xff]
    %v1672 = vld [vmem:[#allocation3 + $0x90] sm:$0xff]
    %v1673 = vld [vmem:[#allocation3 + $0x98] sm:$0xff]
    %v1674 = vld [vmem:[#allocation3 + $0xa0] sm:$0xff]
    %v1675 = vld [vmem:[#allocation3 + $0xa8] sm:$0xff]
    %v1676 = vld [vmem:[#allocation3 + $0xb0] sm:$0xff]
    %v1677 = vld [vmem:[#allocation3 + $0xb8] sm:$0xff]
    %v1678 = vld [vmem:[#allocation3 + $0xc0] sm:$0xff]
    %v1679 = vld [vmem:[#allocation3 + $0xc8] sm:$0xff]
    %v1680 = vld [vmem:[#allocation3 + $0xd0] sm:$0xff]
    %v1681 = vld [vmem:[#allocation3 + $0xd8] sm:$0xff]
    %v1682 = vld [vmem:[#allocation3 + $0xe0] sm:$0xff]
    %v1683 = vld [vmem:[#allocation3 + $0xe8] sm:$0xff]
    %v1684 = vld [vmem:[#allocation3 + $0xf0] sm:$0xff]
    %v1685 = vld [vmem:[#allocation3 + $0xf8] sm:$0xff]
    %v1686 = vld [vmem:[%s4] sm:$0xff]
    %v1687 = vld [vmem:[%s4 + $0x8] sm:$0xff]
    %v1688 = vld [vmem:[%s4 + $0x10] sm:$0xff]
    %v1689 = vld [vmem:[%s4 + $0x18] sm:$0xff]
    %v1690 = vld [vmem:[%s4 + $0x20] sm:$0xff]
    %v1691 = vld [vmem:[%s4 + $0x28] sm:$0xff]
    %v1692 = vld [vmem:[%s4 + $0x30] sm:$0xff]
    %v1693 = vld [vmem:[%s4 + $0x38] sm:$0xff]
    %v1694 = vld [vmem:[%s4 + $0x40] sm:$0xff]
    %v1695 = vld [vmem:[%s4 + $0x48] sm:$0xff]
    %v1696 = vld [vmem:[%s4 + $0x50] sm:$0xff]
    %v1697 = vld [vmem:[%s4 + $0x58] sm:$0xff]
    %v1698 = vld [vmem:[%s4 + $0x60] sm:$0xff]
    %v1699 = vld [vmem:[%s4 + $0x68] sm:$0xff]
    %v1700 = vld [vmem:[%s4 + $0x70] sm:$0xff]
    %v1701 = vld [vmem:[%s4 + $0x78] sm:$0xff]
    %v1702 = vld [vmem:[%s4 + $0x80] sm:$0xff]
    %v1703 = vld [vmem:[%s4 + $0x88] sm:$0xff]
    %v1705 = vsel %vm902, %v1655, 0
    %v1708 = vsel %vm902, %v1657, 0
    %v1711 = vsel %vm902, %v1659, 0
    %v1714 = vsel %vm902, %v1661, 0
    %v1717 = vsel %vm902, %v1663, 0
    %v1720 = vsel %vm902, %v1665, 0
    %v1723 = vsel %vm902, %v1667, 0
    %v1726 = vsel %vm902, %v1669, 0
    %v1729 = vsel %vm902, %v1671, 0
    %v1732 = vsel %vm902, %v1673, 0
    %v1735 = vsel %vm902, %v1675, 0
    %v1738 = vsel %vm902, %v1677, 0
    %v1741 = vsel %vm902, %v1679, 0
    %v1744 = vsel %vm902, %v1681, 0
    %v1747 = vsel %vm902, %v1683, 0
    %v1750 = vsel %vm902, %v1685, 0
    %1752 = vmatprep.subr.mxu0 0.0
    %1753 = vmatpush1.msra.mxu0 %v1701
    %1754 = vmatprep.subr.mxu0 0.0
    %1755 = vmatpush1.msra.mxu0 %v1700
    %1756 = vmatprep.subr.mxu0 0.0
    %1757 = vmatpush1.msra.mxu0 %v1699
    %1758 = vmatprep.subr.mxu0 0.0
    %1759 = vmatpush1.msra.mxu0 %v1698
    %1760 = vmatprep.subr.mxu0 0.0
    %1761 = vmatpush1.msra.mxu0 %v1697
    %1762 = vmatprep.subr.mxu0 0.0
    %1763 = vmatpush1.msra.mxu0 %v1696
    %1764 = vmatprep.subr.mxu0 0.0
    %1765 = vmatpush1.msra.mxu0 %v1695
    %1766 = vmatprep.subr.mxu0 0.0
    %1767 = vmatpush1.msra.mxu0 %v1694
    %1768 = vmatprep.subr.mxu0 0.0
    %1769 = vmatpush1.msra.mxu0 %v1693
    %1770 = vmatprep.subr.mxu0 0.0
    %1771 = vmatpush1.msra.mxu0 %v1692
    %1772 = vmatprep.subr.mxu0 0.0
    %1773 = vmatpush1.msra.mxu0 %v1691
    %1774 = vmatprep.subr.mxu0 0.0
    %1775 = vmatpush1.msra.mxu0 %v1690
    %1776 = vmatprep.subr.mxu0 0.0
    %1777 = vmatpush1.msra.mxu0 %v1689
    %1778 = vmatprep.subr.mxu0 0.0
    %1779 = vmatpush1.msra.mxu0 %v1688
    %1780 = vmatprep.subr.mxu0 0.0
    %1781 = vmatpush1.msra.mxu0 %v1687
    %1782 = vmatprep.subr.mxu0 0.0
    %1783 = vmatpush1.msra.mxu0 %v1686
    %1784 = vmatprep.subr.mxu0 0.0
    %1785 = vmatpush2.msra.mxu0 0.0
    %1786 = vmatprep.subr.mxu0 0.0
    %1787 = vmatpush2.msra.mxu0 0.0
    %1788 = vmatprep.subr.mxu0 0.0
    %1789 = vmatpush2.msra.mxu0 0.0
    %1790 = vmatprep.subr.mxu0 0.0
    %1791 = vmatpush2.msra.mxu0 0.0
    %1792 = vmatprep.subr.mxu0 0.0
    %1793 = vmatpush2.msra.mxu0 0.0
    %1794 = vmatprep.subr.mxu0 0.0
    %1795 = vmatpush2.msra.mxu0 0.0
    %1796 = vmatprep.subr.mxu0 0.0
    %1797 = vmatpush2.msra.mxu0 0.0
    %1798 = vmatprep.subr.mxu0 0.0
    %1799 = vmatpush2.msra.mxu0 0.0
    %1800 = vmatprep.subr.mxu0 0.0
    %1801 = vmatpush2.msra.mxu0 0.0
    %1802 = vmatprep.subr.mxu0 0.0
    %1803 = vmatpush2.msra.mxu0 0.0
    %1804 = vmatprep.subr.mxu0 0.0
    %1805 = vmatpush2.msra.mxu0 0.0
    %1806 = vmatprep.subr.mxu0 0.0
    %1807 = vmatpush2.msra.mxu0 0.0
    %1808 = vmatprep.subr.mxu0 0.0
    %1809 = vmatpush2.msra.mxu0 0.0
    %1810 = vmatprep.subr.mxu0 0.0
    %1811 = vmatpush2.msra.mxu0 0.0
    %1812 = vmatprep.subr.mxu0 0.0
    %1813 = vmatpush2.msra.mxu0 %v1703
    %1814 = vmatprep.subr.mxu0 0.0
    %1815 = vmatpush2.msra.mxu0 %v1702
    %1816 = vmatprep.mubr.f32.mxu0 %v1705
    %1817 = vmatmul.mubr.f32.gmra.mxu0 %v1654
    %v1818 = vpop.f32.mrf.mxu0
    %v1819 = vadd.f32 0.0, %v1818
    %v1820 = vpop.f32.mrf.mxu0
    %1821 = vmatprep.mubr.f32.mxu0 %v1708
    %1822 = vmatmul.mubr.f32.gmra.mxu0 %v1656
    %v1823 = vpop.f32.mrf.mxu0
    %v1824 = vadd.f32 0.0, %v1823
    %v1825 = vpop.f32.mrf.mxu0
    %1826 = vmatprep.mubr.f32.mxu0 %v1711
    %1827 = vmatmul.mubr.f32.gmra.mxu0 %v1658
    %v1828 = vpop.f32.mrf.mxu0
    %v1829 = vadd.f32 0.0, %v1828
    %v1830 = vpop.f32.mrf.mxu0
    %1831 = vmatprep.mubr.f32.mxu0 %v1714
    %1832 = vmatmul.mubr.f32.gmra.mxu0 %v1660
    %v1833 = vpop.f32.mrf.mxu0
    %v1834 = vadd.f32 0.0, %v1833
    %v1835 = vpop.f32.mrf.mxu0
    %1836 = vmatprep.mubr.f32.mxu0 %v1717
    %1837 = vmatmul.mubr.f32.gmra.mxu0 %v1662
    %v1838 = vpop.f32.mrf.mxu0
    %v1839 = vadd.f32 0.0, %v1838
    %v1840 = vpop.f32.mrf.mxu0
    %1841 = vmatprep.mubr.f32.mxu0 %v1720
    %1842 = vmatmul.mubr.f32.gmra.mxu0 %v1664
    %v1843 = vpop.f32.mrf.mxu0
    %v1844 = vadd.f32 0.0, %v1843
    %v1845 = vpop.f32.mrf.mxu0
    %1846 = vmatprep.mubr.f32.mxu0 %v1723
    %1847 = vmatmul.mubr.f32.gmra.mxu0 %v1666
    %v1848 = vpop.f32.mrf.mxu0
    %v1849 = vadd.f32 0.0, %v1848
    %v1850 = vpop.f32.mrf.mxu0
    %1851 = vmatprep.mubr.f32.mxu0 %v1726
    %1852 = vmatmul.mubr.f32.gmra.mxu0 %v1668
    %v1853 = vpop.f32.mrf.mxu0
    %v1854 = vadd.f32 0.0, %v1853
    %v1855 = vpop.f32.mrf.mxu0
    %1856 = vmatprep.mubr.f32.mxu0 %v1729
    %1857 = vmatmul.mubr.f32.gmra.mxu0 %v1670
    %v1858 = vpop.f32.mrf.mxu0
    %v1859 = vadd.f32 0.0, %v1858
    %v1860 = vpop.f32.mrf.mxu0
    %1861 = vmatprep.mubr.f32.mxu0 %v1732
    %1862 = vmatmul.mubr.f32.gmra.mxu0 %v1672
    %v1863 = vpop.f32.mrf.mxu0
    %v1864 = vadd.f32 0.0, %v1863
    %v1865 = vpop.f32.mrf.mxu0
    %1866 = vmatprep.mubr.f32.mxu0 %v1735
    %1867 = vmatmul.mubr.f32.gmra.mxu0 %v1674
    %v1868 = vpop.f32.mrf.mxu0
    %v1869 = vadd.f32 0.0, %v1868
    %v1870 = vpop.f32.mrf.mxu0
    %1871 = vmatprep.mubr.f32.mxu0 %v1738
    %1872 = vmatmul.mubr.f32.gmra.mxu0 %v1676
    %v1873 = vpop.f32.mrf.mxu0
    %v1874 = vadd.f32 0.0, %v1873
    %v1875 = vpop.f32.mrf.mxu0
    %1876 = vmatprep.mubr.f32.mxu0 %v1741
    %1877 = vmatmul.mubr.f32.gmra.mxu0 %v1678
    %v1878 = vpop.f32.mrf.mxu0
    %v1879 = vadd.f32 0.0, %v1878
    %v1880 = vpop.f32.mrf.mxu0
    %1881 = vmatprep.mubr.f32.mxu0 %v1744
    %1882 = vmatmul.mubr.f32.gmra.mxu0 %v1680
    %v1883 = vpop.f32.mrf.mxu0
    %v1884 = vadd.f32 0.0, %v1883
    %v1885 = vpop.f32.mrf.mxu0
    %1886 = vmatprep.mubr.f32.mxu0 %v1747
    %1887 = vmatmul.mubr.f32.gmra.mxu0 %v1682
    %v1888 = vpop.f32.mrf.mxu0
    %v1889 = vadd.f32 0.0, %v1888
    %v1890 = vpop.f32.mrf.mxu0
    %1891 = vmatprep.mubr.f32.mxu0 %v1750
    %1892 = vmatmul.mubr.f32.gmra.mxu0 %v1684
    %v1893 = vpop.f32.mrf.mxu0
    %v1894 = vadd.f32 0.0, %v1893
    %v1895 = vpop.f32.mrf.mxu0
    %1896 = vdwg.mxu0
    %v1897 = vsel %vm902, %v1819, 0.0
    %v1898 = vsel %vm902, %v1824, 0.0
    %v1899 = vadd.f32 %v1897, %v1898
    %v1900 = vsel %vm902, %v1829, 0.0
    %v1901 = vadd.f32 %v1899, %v1900
    %v1902 = vsel %vm902, %v1834, 0.0
    %v1903 = vadd.f32 %v1901, %v1902
    %v1904 = vsel %vm902, %v1839, 0.0
    %v1905 = vadd.f32 %v1903, %v1904
    %v1906 = vsel %vm902, %v1844, 0.0
    %v1907 = vadd.f32 %v1905, %v1906
    %v1908 = vsel %vm902, %v1849, 0.0
    %v1909 = vadd.f32 %v1907, %v1908
    %v1910 = vsel %vm902, %v1854, 0.0
    %v1911 = vadd.f32 %v1909, %v1910
    %v1912 = vsel %vm902, %v1859, 0.0
    %v1913 = vadd.f32 %v1911, %v1912
    %v1914 = vsel %vm902, %v1864, 0.0
    %v1915 = vadd.f32 %v1913, %v1914
    %v1916 = vsel %vm902, %v1869, 0.0
    %v1917 = vadd.f32 %v1915, %v1916
    %v1918 = vsel %vm902, %v1874, 0.0
    %v1919 = vadd.f32 %v1917, %v1918
    %v1920 = vsel %vm902, %v1879, 0.0
    %v1921 = vadd.f32 %v1919, %v1920
    %v1922 = vsel %vm902, %v1884, 0.0
    %v1923 = vadd.f32 %v1921, %v1922
    %v1924 = vsel %vm902, %v1889, 0.0
    %v1925 = vadd.f32 %v1923, %v1924
    %v1926 = vsel %vm902, %v1894, 0.0
    %v1927 = vadd.f32 %v1925, %v1926
    %v1928 = vrot.slane %v1927, 4
    %v1929 = vadd.f32 %v1927, %v1928
    %v1930 = vrot.slane %v1929, 2
    %v1931 = vadd.f32 %v1929, %v1930
    %v1932 = vrot.slane %v1931, 1
    %v1933 = vadd.f32 %v1931, %v1932
    %v1934 = vmul.f32 %v1933, %v940
    %v1935 = vsub.f32 %v1819, %v1934
    %v1936 = vsub.f32 %v1824, %v1934
    %v1937 = vsub.f32 %v1829, %v1934
    %v1938 = vsub.f32 %v1834, %v1934
    %v1939 = vsub.f32 %v1839, %v1934
    %v1940 = vsub.f32 %v1844, %v1934
    %v1941 = vsub.f32 %v1849, %v1934
    %v1942 = vsub.f32 %v1854, %v1934
    %v1943 = vsub.f32 %v1859, %v1934
    %v1944 = vsub.f32 %v1864, %v1934
    %v1945 = vsub.f32 %v1869, %v1934
    %v1946 = vsub.f32 %v1874, %v1934
    %v1947 = vsub.f32 %v1879, %v1934
    %v1948 = vsub.f32 %v1884, %v1934
    %v1949 = vsub.f32 %v1889, %v1934
    %v1950 = vsub.f32 %v1894, %v1934
    %v1951 = vmul.f32 %v1935, %v1935
    %v1952 = vmul.f32 %v1936, %v1936
    %v1953 = vmul.f32 %v1937, %v1937
    %v1954 = vmul.f32 %v1938, %v1938
    %v1955 = vmul.f32 %v1939, %v1939
    %v1956 = vmul.f32 %v1940, %v1940
    %v1957 = vmul.f32 %v1941, %v1941
    %v1958 = vmul.f32 %v1942, %v1942
    %v1959 = vmul.f32 %v1943, %v1943
    %v1960 = vmul.f32 %v1944, %v1944
    %v1961 = vmul.f32 %v1945, %v1945
    %v1962 = vmul.f32 %v1946, %v1946
    %v1963 = vmul.f32 %v1947, %v1947
    %v1964 = vmul.f32 %v1948, %v1948
    %v1965 = vmul.f32 %v1949, %v1949
    %v1966 = vmul.f32 %v1950, %v1950
    %v1967 = vsel %vm902, %v1951, 0.0
    %v1968 = vsel %vm902, %v1952, 0.0
    %v1969 = vadd.f32 %v1967, %v1968
    %v1970 = vsel %vm902, %v1953, 0.0
    %v1971 = vadd.f32 %v1969, %v1970
    %v1972 = vsel %vm902, %v1954, 0.0
    %v1973 = vadd.f32 %v1971, %v1972
    %v1974 = vsel %vm902, %v1955, 0.0
    %v1975 = vadd.f32 %v1973, %v1974
    %v1976 = vsel %vm902, %v1956, 0.0
    %v1977 = vadd.f32 %v1975, %v1976
    %v1978 = vsel %vm902, %v1957, 0.0
    %v1979 = vadd.f32 %v1977, %v1978
    %v1980 = vsel %vm902, %v1958, 0.0
    %v1981 = vadd.f32 %v1979, %v1980
    %v1982 = vsel %vm902, %v1959, 0.0
    %v1983 = vadd.f32 %v1981, %v1982
    %v1984 = vsel %vm902, %v1960, 0.0
    %v1985 = vadd.f32 %v1983, %v1984
    %v1986 = vsel %vm902, %v1961, 0.0
    %v1987 = vadd.f32 %v1985, %v1986
    %v1988 = vsel %vm902, %v1962, 0.0
    %v1989 = vadd.f32 %v1987, %v1988
    %v1990 = vsel %vm902, %v1963, 0.0
    %v1991 = vadd.f32 %v1989, %v1990
    %v1992 = vsel %vm902, %v1964, 0.0
    %v1993 = vadd.f32 %v1991, %v1992
    %v1994 = vsel %vm902, %v1965, 0.0
    %v1995 = vadd.f32 %v1993, %v1994
    %v1996 = vsel %vm902, %v1966, 0.0
    %v1997 = vadd.f32 %v1995, %v1996
    %v1998 = vrot.slane %v1997, 4
    %v1999 = vadd.f32 %v1997, %v1998
    %v2000 = vrot.slane %v1999, 2
    %v2001 = vadd.f32 %v1999, %v2000
    %v2002 = vrot.slane %v2001, 1
    %v2003 = vadd.f32 %v2001, %v2002
    %v2004 = vmul.f32 %v2003, %v940
    %v2005 = vadd.f32 %v2004, 1e-05
    %v2006 = vrsqrt.pop %v2005
    %v2007 = vmul.f32 %v1935, %v2006
    %v2008 = vmul.f32 %v1936, %v2006
    %v2009 = vmul.f32 %v1937, %v2006
    %v2010 = vmul.f32 %v1938, %v2006
    %v2011 = vmul.f32 %v1939, %v2006
    %v2012 = vmul.f32 %v1940, %v2006
    %v2013 = vmul.f32 %v1941, %v2006
    %v2014 = vmul.f32 %v1942, %v2006
    %v2015 = vmul.f32 %v1943, %v2006
    %v2016 = vmul.f32 %v1944, %v2006
    %v2017 = vmul.f32 %v1945, %v2006
    %v2018 = vmul.f32 %v1946, %v2006
    %v2019 = vmul.f32 %v1947, %v2006
    %v2020 = vmul.f32 %v1948, %v2006
    %v2021 = vmul.f32 %v1949, %v2006
    %v2022 = vmul.f32 %v1950, %v2006
    %v2023 = vld [vmem:[%s5] sm:$0x1]
    %v2025 = vlaneseq
    %v2026 = vshrl.u32 %v2025, 7
    %v2027 = vsub.s32 0, %v2026
    %v2028 = vrot.slane %v2023, %v2027
    %v2030 = vmul.f32 %v2007, %v2028
    %v2031 = vmul.f32 %v2008, %v2028
    %v2032 = vmul.f32 %v2009, %v2028
    %v2033 = vmul.f32 %v2010, %v2028
    %v2034 = vmul.f32 %v2011, %v2028
    %v2035 = vmul.f32 %v2012, %v2028
    %v2036 = vmul.f32 %v2013, %v2028
    %v2037 = vmul.f32 %v2014, %v2028
    %v2038 = vmul.f32 %v2015, %v2028
    %v2039 = vmul.f32 %v2016, %v2028
    %v2040 = vmul.f32 %v2017, %v2028
    %v2041 = vmul.f32 %v2018, %v2028
    %v2042 = vmul.f32 %v2019, %v2028
    %v2043 = vmul.f32 %v2020, %v2028
    %v2044 = vmul.f32 %v2021, %v2028
    %v2045 = vmul.f32 %v2022, %v2028
    %v2046 = vld [vmem:[%s6] sm:$0x1]
    %v2048 = vlaneseq
    %v2049 = vshrl.u32 %v2048, 7
    %v2050 = vsub.s32 0, %v2049
    %v2051 = vrot.slane %v2046, %v2050
    %v2053 = vadd.f32 %v2030, %v2051
    %v2054 = vadd.f32 %v2031, %v2051
    %v2055 = vadd.f32 %v2032, %v2051
    %v2056 = vadd.f32 %v2033, %v2051
    %v2057 = vadd.f32 %v2034, %v2051
    %v2058 = vadd.f32 %v2035, %v2051
    %v2059 = vadd.f32 %v2036, %v2051
    %v2060 = vadd.f32 %v2037, %v2051
    %v2061 = vadd.f32 %v2038, %v2051
    %v2062 = vadd.f32 %v2039, %v2051
    %v2063 = vadd.f32 %v2040, %v2051
    %v2064 = vadd.f32 %v2041, %v2051
    %v2065 = vadd.f32 %v2042, %v2051
    %v2066 = vadd.f32 %v2043, %v2051
    %v2067 = vadd.f32 %v2044, %v2051
    %v2068 = vadd.f32 %v2045, %v2051
    %v2069 = vmax.f32 %v2053, 0.0
    %v2070 = vmax.f32 %v2054, 0.0
    %v2071 = vmax.f32 %v2055, 0.0
    %v2072 = vmax.f32 %v2056, 0.0
    %v2073 = vmax.f32 %v2057, 0.0
    %v2074 = vmax.f32 %v2058, 0.0
    %v2075 = vmax.f32 %v2059, 0.0
    %v2076 = vmax.f32 %v2060, 0.0
    %v2077 = vmax.f32 %v2061, 0.0
    %v2078 = vmax.f32 %v2062, 0.0
    %v2079 = vmax.f32 %v2063, 0.0
    %v2080 = vmax.f32 %v2064, 0.0
    %v2081 = vmax.f32 %v2065, 0.0
    %v2082 = vmax.f32 %v2066, 0.0
    %v2083 = vmax.f32 %v2067, 0.0
    %v2084 = vmax.f32 %v2068, 0.0
    %2085 = vst.msk [vmem:[#allocation4] sm:$0xff] %vm902, %v2069
    %2086 = vst.msk [vmem:[#allocation4 + $0x8] sm:$0xff] %vm902, %v2070
    %2087 = vst.msk [vmem:[#allocation4 + $0x10] sm:$0xff] %vm902, %v2071
    %2088 = vst.msk [vmem:[#allocation4 + $0x18] sm:$0xff] %vm902, %v2072
    %2089 = vst.msk [vmem:[#allocation4 + $0x20] sm:$0xff] %vm902, %v2073
    %2090 = vst.msk [vmem:[#allocation4 + $0x28] sm:$0xff] %vm902, %v2074
    %2091 = vst.msk [vmem:[#allocation4 + $0x30] sm:$0xff] %vm902, %v2075
    %2092 = vst.msk [vmem:[#allocation4 + $0x38] sm:$0xff] %vm902, %v2076
    %2093 = vst.msk [vmem:[#allocation4 + $0x40] sm:$0xff] %vm902, %v2077
    %2094 = vst.msk [vmem:[#allocation4 + $0x48] sm:$0xff] %vm902, %v2078
    %2095 = vst.msk [vmem:[#allocation4 + $0x50] sm:$0xff] %vm902, %v2079
    %2096 = vst.msk [vmem:[#allocation4 + $0x58] sm:$0xff] %vm902, %v2080
    %2097 = vst.msk [vmem:[#allocation4 + $0x60] sm:$0xff] %vm902, %v2081
    %2098 = vst.msk [vmem:[#allocation4 + $0x68] sm:$0xff] %vm902, %v2082
    %2099 = vst.msk [vmem:[#allocation4 + $0x70] sm:$0xff] %vm902, %v2083
    %2100 = vst.msk [vmem:[#allocation4 + $0x78] sm:$0xff] %vm902, %v2084
    // Predicated region
    $region30: #{down_forward.1} parent=1 // pred_check
      _
    $region31: #{down_forward.1} parent=1 // pred_check_branch
      %2102 = sbr.rel (0) target = $region33
    $region32: #{down_forward.1} parent=1 // pred_region
      %s2104 = ssub.s32 2048, 2048
      %2105 = vsyncadd [#allocation5], %s2104
      %s2106 = sshll.u32 [#allocation4], 4
      %s2107 = int_to_ptr.vmem [resolvable:$true] %s2106
      %2112 = dma.vmem_to_hbm [thread:$0]  %s2107, 2048, %s7, [#allocation5], 128, 128, 8
    $region33: #{down_forward.1} parent=1 // pred_fallthru
      _
    // Predicated region
    $region34: #{down_forward.1} parent=1 // pred_check
      _
    $region35: #{down_forward.1} parent=1 // pred_check_branch
      %2114 = sbr.rel (0) target = $region37
    $region36: #{down_forward.1} parent=1 // pred_region
      %2115 = dma.done [#allocation5], 2048
    $region37: #{down_forward.1} parent=1 // pred_fallthru
      _
    %2116 = vsyncpa [#allocation5], 1

</llo_original>
